<compile_context>
chip_gen: v5e
topology: v5e:2x2
jax: 0.10.0
libtpu: 0.0.40
codegen_flags: <defaults>
</compile_context>

<pallas_src>
import functools
import math

import jax
import jax.numpy as jnp
from jax.experimental import pallas as pl
from jax.experimental.pallas import tpu as pltpu


def _mhsa_kernel(x_ref, w_qkv_ref, o_ref, *, head: int, head_dim: int,
                 inv_scale: float):
    # x_ref:     (Bt, N, D)   -- batch block, full sequence + embedding
    # w_qkv_ref: (D, 3D)      -- fused Wq^T|Wk^T|Wv^T, bf16, constant block
    # o_ref:     (Bt, N, D)   -- output directly in [B, N, D] layout
    bt, n, d = x_ref.shape

    # Fused QKV projection: one bf16 x bf16 -> f32 MXU dot over all rows.
    x = x_ref[...].reshape(bt * n, d).astype(jnp.bfloat16)            # [M, D]
    qkv = jnp.dot(x, w_qkv_ref[...],
                  preferred_element_type=jnp.float32)                 # [M, 3D]
    qkv = qkv.reshape(bt, n, 3 * d)
    q = qkv[:, :, 0 * d:1 * d]                                        # [Bt,N,D]
    k = qkv[:, :, 1 * d:2 * d]
    v = qkv[:, :, 2 * d:3 * d]

    # Static unroll over heads (head_dim = 128 -> all slices lane-aligned).
    outs = []
    for h in range(head):
        lo = h * head_dim
        hi = lo + head_dim
        qh = q[:, :, lo:hi]                                           # [Bt,N,hd]
        kh = k[:, :, lo:hi]
        vh = v[:, :, lo:hi]

        # q @ k^T, batched over Bt, contracting head_dim (no transpose).
        s = jnp.einsum("bqd,bkd->bqk", qh, kh,
                       preferred_element_type=jnp.float32) * inv_scale

        # Softmax over the QUERY axis (matches F.softmax(..., dim=2) on the
        # [B, H, Nq, Nk] tensor in the PyTorch module) -> axis=1 here.
        s = s - jnp.max(s, axis=1, keepdims=True)
        p = jnp.exp(s)
        denom = jnp.sum(p, axis=1, keepdims=True)
        p = p * pl.reciprocal(denom, approx=True)

        outs.append(jnp.einsum("bqk,bkd->bqd", p, vh,
                               preferred_element_type=jnp.float32))   # [Bt,N,hd]

    # Single coalesced, lane-dense (3x128) store of the whole output block.
    o_ref[...] = jnp.concatenate(outs, axis=-1).astype(o_ref.dtype)


def fuse_qkv_weights(wq_t, wk_t, wv_t):
    """One-time weight prep: [D,D] x3 (transposed) -> bf16 [D, 3D]."""
    return jnp.concatenate([wq_t, wk_t, wv_t], axis=1).astype(jnp.bfloat16)


def multi_head_self_attention(x, w_qkv_t, *, head: int):
    """x: [B, N, D] f32; w_qkv_t: [D, 3D] bf16 fused transposed QKV weights."""
    B, N, D = x.shape
    head_dim = D // head
    inv_scale = 1.0 / math.sqrt(float(head_dim))

    # Batch-block size: aim for >= ~256 query rows per grid step so the MXU M
    # dimension is filled (v6e/v7x); at tiny B this collapses to a single grid
    # step so the weights are streamed from HBM exactly once.
    rows_target = 256
    bt = min(B, max(1, rows_target // max(N, 1)))
    while B % bt != 0:
        bt -= 1
    grid = (B // bt,)
    # VMEM footprint per step (weights bf16 + small x/out blocks) is ~1 MiB at
    # D=384, far below even v7x's 64 MiB -- no need to shrink tiles; the full
    # query axis stays resident so the query-axis softmax needs no cross-tile
    # running reduction.

    kernel = functools.partial(_mhsa_kernel, head=head, head_dim=head_dim,
                               inv_scale=inv_scale)

    return pl.pallas_call(
        kernel,
        out_shape=jax.ShapeDtypeStruct((B, N, D), x.dtype),
        grid_spec=pltpu.PrefetchScalarGridSpec(
            num_scalar_prefetch=0,
            grid=grid,
            in_specs=[
                pl.BlockSpec((bt, N, D), lambda b: (b, 0, 0)),   # x row block
                pl.BlockSpec((D, 3 * D), lambda b: (0, 0)),      # fused W (const)
            ],
            out_specs=pl.BlockSpec((bt, N, D), lambda b: (b, 0, 0)),
        ),
        compiler_params=pltpu.CompilerParams(
            dimension_semantics=("parallel",)),
    )(x, w_qkv_t)


def _reference(x, wq_t, wk_t, wv_t, head: int):
    """Plain-JAX f32 replica of the PyTorch forward (for verification)."""
    B, N, D = x.shape
    hd = D // head
    q = (x @ wq_t).reshape(B, N, head, hd).transpose(0, 2, 1, 3)
    k = (x @ wk_t).reshape(B, N, head, hd).transpose(0, 2, 1, 3)
    v = (x @ wv_t).reshape(B, N, head, hd).transpose(0, 2, 1, 3)
    s = jnp.einsum("bhqd,bhkd->bhqk", q, k) / math.sqrt(float(hd))
    p = jax.nn.softmax(s, axis=2)   # dim=2, exactly as in the PyTorch module
    o = jnp.einsum("bhqk,bhkd->bhqd", p, v)
    return o.transpose(0, 2, 1, 3).reshape(B, N, D)


if __name__ == "__main__":
    # Module defaults: emb_dim=384, head=3 -> head_dim=128.
    B, N, D, HEAD = 2, 8, 384, 3

    key = jax.random.PRNGKey(0)
    kx, kq, kk, kv = jax.random.split(key, 4)

    x = jax.random.normal(kx, (B, N, D), dtype=jnp.float32)

    # Deterministic Linear-style init (uniform in +-1/sqrt(fan_in)); stored
    # transposed as [D_in, D_out] so that x @ w_t == nn.Linear(x) (bias=False).
    bound = 1.0 / math.sqrt(D)
    wq_t = jax.random.uniform(kq, (D, D), jnp.float32, -bound, bound)
    wk_t = jax.random.uniform(kk, (D, D), jnp.float32, -bound, bound)
    wv_t = jax.random.uniform(kv, (D, D), jnp.float32, -bound, bound)

    # One-time (module-init-style) fusion + bf16 cast of the projection weights.
    w_qkv_t = fuse_qkv_weights(wq_t, wk_t, wv_t)

    out = multi_head_self_attention(x, w_qkv_t, head=HEAD)
    out = jax.block_until_ready(out)

    ref = _reference(x, wq_t, wk_t, wv_t, HEAD)
    assert out.shape == (B, N, D)
    # Tolerance covers bf16 projection inputs (f32 accumulation) and the
    # approximate-reciprocal softmax denominator; measured error is ~1e-3.
    assert jnp.allclose(out, ref, atol=2e-2, rtol=2e-2), "mismatch vs reference"

    print("KERNEL_OK")
</pallas_src>

<mosaic_0001>
module attributes {stable_mosaic.version = 11 : i64} {
  func.func @_mhsa_kernel(%arg0: i32, %arg1: memref<2x8x384xf32, #tpu.memory_space<vmem>>, %arg2: memref<384x1152xbf16, #tpu.memory_space<vmem>>, %arg3: memref<2x8x384xf32, #tpu.memory_space<vmem>>) attributes {dimension_semantics = [#tpu.dimension_semantics<parallel>], iteration_bounds = array<i64: 1>, scalar_prefetch = 0 : i64, scratch_operands = 0 : i64, tpu.core_type = #tpu.core_type<tc>, window_params = [{transform_indices = @transform_0, window_bounds = array<i64: 2, 8, 384>}, {pipeline_mode = #tpu.pipeline_mode<synchronous>, transform_indices = @transform_1, window_bounds = array<i64: 384, 1152>}, {transform_indices = @transform_2, window_bounds = array<i64: 2, 8, 384>}]} {
    %c0 = arith.constant 0 : index
    %c0_0 = arith.constant 0 : index
    %c0_1 = arith.constant 0 : index
    %0 = vector.load %arg1[%c0, %c0_0, %c0_1] : memref<2x8x384xf32, #tpu.memory_space<vmem>>, vector<2x8x384xf32>
    %1 = vector.shape_cast %0 : vector<2x8x384xf32> to vector<16x384xf32>
    %2 = arith.truncf %1 : vector<16x384xf32> to vector<16x384xbf16>
    %c0_2 = arith.constant 0 : index
    %c0_3 = arith.constant 0 : index
    %3 = vector.load %arg2[%c0_2, %c0_3] : memref<384x1152xbf16, #tpu.memory_space<vmem>>, vector<384x1152xbf16>
    %cst = arith.constant dense<0.000000e+00> : vector<16x1152xf32>
    %4 = tpu.matmul %2, %3, %cst {dimension_numbers = #tpu.dot_dimension_numbers<[1], [0], [0], [1], [0, 0, 1, 1], [], []>} : vector<16x384xbf16>, vector<384x1152xbf16>, vector<16x1152xf32> -> vector<16x1152xf32>
    %5 = vector.shape_cast %4 : vector<16x1152xf32> to vector<2x8x1152xf32>
    %6 = vector.extract_strided_slice %5 {offsets = [0, 0, 0], sizes = [2, 8, 384], strides = [1, 1, 1]} : vector<2x8x1152xf32> to vector<2x8x384xf32>
    %7 = vector.extract_strided_slice %5 {offsets = [0, 0, 384], sizes = [2, 8, 384], strides = [1, 1, 1]} : vector<2x8x1152xf32> to vector<2x8x384xf32>
    %8 = vector.extract_strided_slice %5 {offsets = [0, 0, 768], sizes = [2, 8, 384], strides = [1, 1, 1]} : vector<2x8x1152xf32> to vector<2x8x384xf32>
    %9 = vector.extract_strided_slice %6 {offsets = [0, 0, 0], sizes = [2, 8, 128], strides = [1, 1, 1]} : vector<2x8x384xf32> to vector<2x8x128xf32>
    %10 = vector.extract_strided_slice %7 {offsets = [0, 0, 0], sizes = [2, 8, 128], strides = [1, 1, 1]} : vector<2x8x384xf32> to vector<2x8x128xf32>
    %11 = vector.extract_strided_slice %8 {offsets = [0, 0, 0], sizes = [2, 8, 128], strides = [1, 1, 1]} : vector<2x8x384xf32> to vector<2x8x128xf32>
    "tpu.trace_start"() <{level = 10 : i32, message = "bqd,bkd->bqk"}> : () -> ()
    %cst_4 = arith.constant dense<0.000000e+00> : vector<2x8x8xf32>
    %12 = tpu.matmul %9, %10, %cst_4 {dimension_numbers = #tpu.dot_dimension_numbers<[2], [2], [1], [1], [0, 0, 0, 1, 1, 1], [0], [0]>} : vector<2x8x128xf32>, vector<2x8x128xf32>, vector<2x8x8xf32> -> vector<2x8x8xf32>
    "tpu.trace_stop"() : () -> ()
    %cst_5 = arith.constant 0.0883883461 : f32
    %13 = vector.broadcast %cst_5 : f32 to vector<2x8x8xf32>
    %14 = arith.mulf %12, %13 : vector<2x8x8xf32>
    %cst_6 = arith.constant dense<0xFF800000> : vector<2x8xf32>
    %15 = vector.multi_reduction <maximumf>, %14, %cst_6 [1] : vector<2x8x8xf32> to vector<2x8xf32>
    %16 = vector.shape_cast %15 : vector<2x8xf32> to vector<2x1x8xf32>
    %17 = vector.broadcast %16 : vector<2x1x8xf32> to vector<2x8x8xf32>
    %18 = arith.subf %14, %17 : vector<2x8x8xf32>
    %19 = math.exp %18 : vector<2x8x8xf32>
    %cst_7 = arith.constant dense<0.000000e+00> : vector<2x8xf32>
    %20 = vector.multi_reduction <add>, %19, %cst_7 [1] : vector<2x8x8xf32> to vector<2x8xf32>
    %21 = vector.shape_cast %20 : vector<2x8xf32> to vector<2x1x8xf32>
    %22 = tpu.reciprocal %21 {approx = true} : vector<2x1x8xf32> -> vector<2x1x8xf32>
    %23 = vector.broadcast %22 : vector<2x1x8xf32> to vector<2x8x8xf32>
    %24 = arith.mulf %19, %23 : vector<2x8x8xf32>
    "tpu.trace_start"() <{level = 10 : i32, message = "bqk,bkd->bqd"}> : () -> ()
    %cst_8 = arith.constant dense<0.000000e+00> : vector<2x8x128xf32>
    %25 = tpu.matmul %24, %11, %cst_8 {dimension_numbers = #tpu.dot_dimension_numbers<[2], [1], [1], [2], [0, 0, 0, 1, 1, 2], [0], [0]>} : vector<2x8x8xf32>, vector<2x8x128xf32>, vector<2x8x128xf32> -> vector<2x8x128xf32>
    "tpu.trace_stop"() : () -> ()
    %26 = vector.extract_strided_slice %6 {offsets = [0, 0, 128], sizes = [2, 8, 128], strides = [1, 1, 1]} : vector<2x8x384xf32> to vector<2x8x128xf32>
    %27 = vector.extract_strided_slice %7 {offsets = [0, 0, 128], sizes = [2, 8, 128], strides = [1, 1, 1]} : vector<2x8x384xf32> to vector<2x8x128xf32>
    %28 = vector.extract_strided_slice %8 {offsets = [0, 0, 128], sizes = [2, 8, 128], strides = [1, 1, 1]} : vector<2x8x384xf32> to vector<2x8x128xf32>
    "tpu.trace_start"() <{level = 10 : i32, message = "bqd,bkd->bqk"}> : () -> ()
    %cst_9 = arith.constant dense<0.000000e+00> : vector<2x8x8xf32>
    %29 = tpu.matmul %26, %27, %cst_9 {dimension_numbers = #tpu.dot_dimension_numbers<[2], [2], [1], [1], [0, 0, 0, 1, 1, 1], [0], [0]>} : vector<2x8x128xf32>, vector<2x8x128xf32>, vector<2x8x8xf32> -> vector<2x8x8xf32>
    "tpu.trace_stop"() : () -> ()
    %cst_10 = arith.constant 0.0883883461 : f32
    %30 = vector.broadcast %cst_10 : f32 to vector<2x8x8xf32>
    %31 = arith.mulf %29, %30 : vector<2x8x8xf32>
    %cst_11 = arith.constant dense<0xFF800000> : vector<2x8xf32>
    %32 = vector.multi_reduction <maximumf>, %31, %cst_11 [1] : vector<2x8x8xf32> to vector<2x8xf32>
    %33 = vector.shape_cast %32 : vector<2x8xf32> to vector<2x1x8xf32>
    %34 = vector.broadcast %33 : vector<2x1x8xf32> to vector<2x8x8xf32>
    %35 = arith.subf %31, %34 : vector<2x8x8xf32>
    %36 = math.exp %35 : vector<2x8x8xf32>
    %cst_12 = arith.constant dense<0.000000e+00> : vector<2x8xf32>
    %37 = vector.multi_reduction <add>, %36, %cst_12 [1] : vector<2x8x8xf32> to vector<2x8xf32>
    %38 = vector.shape_cast %37 : vector<2x8xf32> to vector<2x1x8xf32>
    %39 = tpu.reciprocal %38 {approx = true} : vector<2x1x8xf32> -> vector<2x1x8xf32>
    %40 = vector.broadcast %39 : vector<2x1x8xf32> to vector<2x8x8xf32>
    %41 = arith.mulf %36, %40 : vector<2x8x8xf32>
    "tpu.trace_start"() <{level = 10 : i32, message = "bqk,bkd->bqd"}> : () -> ()
    %cst_13 = arith.constant dense<0.000000e+00> : vector<2x8x128xf32>
    %42 = tpu.matmul %41, %28, %cst_13 {dimension_numbers = #tpu.dot_dimension_numbers<[2], [1], [1], [2], [0, 0, 0, 1, 1, 2], [0], [0]>} : vector<2x8x8xf32>, vector<2x8x128xf32>, vector<2x8x128xf32> -> vector<2x8x128xf32>
    "tpu.trace_stop"() : () -> ()
    %43 = vector.extract_strided_slice %6 {offsets = [0, 0, 256], sizes = [2, 8, 128], strides = [1, 1, 1]} : vector<2x8x384xf32> to vector<2x8x128xf32>
    %44 = vector.extract_strided_slice %7 {offsets = [0, 0, 256], sizes = [2, 8, 128], strides = [1, 1, 1]} : vector<2x8x384xf32> to vector<2x8x128xf32>
    %45 = vector.extract_strided_slice %8 {offsets = [0, 0, 256], sizes = [2, 8, 128], strides = [1, 1, 1]} : vector<2x8x384xf32> to vector<2x8x128xf32>
    "tpu.trace_start"() <{level = 10 : i32, message = "bqd,bkd->bqk"}> : () -> ()
    %cst_14 = arith.constant dense<0.000000e+00> : vector<2x8x8xf32>
    %46 = tpu.matmul %43, %44, %cst_14 {dimension_numbers = #tpu.dot_dimension_numbers<[2], [2], [1], [1], [0, 0, 0, 1, 1, 1], [0], [0]>} : vector<2x8x128xf32>, vector<2x8x128xf32>, vector<2x8x8xf32> -> vector<2x8x8xf32>
    "tpu.trace_stop"() : () -> ()
    %cst_15 = arith.constant 0.0883883461 : f32
    %47 = vector.broadcast %cst_15 : f32 to vector<2x8x8xf32>
    %48 = arith.mulf %46, %47 : vector<2x8x8xf32>
    %cst_16 = arith.constant dense<0xFF800000> : vector<2x8xf32>
    %49 = vector.multi_reduction <maximumf>, %48, %cst_16 [1] : vector<2x8x8xf32> to vector<2x8xf32>
    %50 = vector.shape_cast %49 : vector<2x8xf32> to vector<2x1x8xf32>
    %51 = vector.broadcast %50 : vector<2x1x8xf32> to vector<2x8x8xf32>
    %52 = arith.subf %48, %51 : vector<2x8x8xf32>
    %53 = math.exp %52 : vector<2x8x8xf32>
    %cst_17 = arith.constant dense<0.000000e+00> : vector<2x8xf32>
    %54 = vector.multi_reduction <add>, %53, %cst_17 [1] : vector<2x8x8xf32> to vector<2x8xf32>
    %55 = vector.shape_cast %54 : vector<2x8xf32> to vector<2x1x8xf32>
    %56 = tpu.reciprocal %55 {approx = true} : vector<2x1x8xf32> -> vector<2x1x8xf32>
    %57 = vector.broadcast %56 : vector<2x1x8xf32> to vector<2x8x8xf32>
    %58 = arith.mulf %53, %57 : vector<2x8x8xf32>
    "tpu.trace_start"() <{level = 10 : i32, message = "bqk,bkd->bqd"}> : () -> ()
    %cst_18 = arith.constant dense<0.000000e+00> : vector<2x8x128xf32>
    %59 = tpu.matmul %58, %45, %cst_18 {dimension_numbers = #tpu.dot_dimension_numbers<[2], [1], [1], [2], [0, 0, 0, 1, 1, 2], [0], [0]>} : vector<2x8x8xf32>, vector<2x8x128xf32>, vector<2x8x128xf32> -> vector<2x8x128xf32>
    "tpu.trace_stop"() : () -> ()
    %60 = tpu.concatenate %25, %42, %59 in 2 : vector<2x8x128xf32>, vector<2x8x128xf32>, vector<2x8x128xf32> -> vector<2x8x384xf32>
    %c0_19 = arith.constant 0 : index
    %c0_20 = arith.constant 0 : index
    %c0_21 = arith.constant 0 : index
    %61 = vector.load %arg3[%c0_19, %c0_20, %c0_21] : memref<2x8x384xf32, #tpu.memory_space<vmem>>, vector<2x8x384xf32>
    tpu.vector_store %arg3[%c0_19, %c0_20, %c0_21], %60 {strides = array<i32>} : memref<2x8x384xf32, #tpu.memory_space<vmem>>, vector<2x8x384xf32>,
    return
  }
  func.func @transform_0(%arg0: i32) -> (i32, i32, i32) {
    %c0_i32 = arith.constant 0 : i32
    %c0_i32_0 = arith.constant 0 : i32
    %c0_i32_1 = arith.constant 0 : i32
    return %arg0, %c0_i32, %c0_i32_0 : i32, i32, i32
  }
  func.func @transform_1(%arg0: i32) -> (i32, i32) {
    %c0_i32 = arith.constant 0 : i32
    %c0_i32_0 = arith.constant 0 : i32
    %c0_i32_1 = arith.constant 0 : i32
    return %c0_i32, %c0_i32_0 : i32, i32
  }
  func.func @transform_2(%arg0: i32) -> (i32, i32, i32) {
    %c0_i32 = arith.constant 0 : i32
    %c0_i32_0 = arith.constant 0 : i32
    %c0_i32_1 = arith.constant 0 : i32
    return %arg0, %c0_i32, %c0_i32_0 : i32, i32, i32
  }
}

</mosaic_0001>

<llo_original>
// kernel: tpu_custom_call.1
$region0: #{tpu_custom_call.1}
  #allocation0 [shape = 'u32[]', space=smem, size = 0x4, offset = 0x4, fixed_abs, tag = 'smem constant byte address 0x4 - core index']
  #allocation1 [shape = 'u32[72,128]{1,0:T(1,128)}', space=vmem, size = 0x9000, scoped, tag = 'internal scratch']
  %s0 = inlined_call_operand.hbm [shape: f32[2,8,384], index: 0, kind: input, shape index: {}]
  %s1 = inlined_call_operand.hbm [shape: bf16[384,1152], index: 1, kind: input, shape index: {}]
  %s2 = inlined_call_operand.hbm [shape: f32[2,8,384], index: 2, kind: output, shape index: {}]
  %s3 = sld [smem:[#allocation0]]
  $region26: #{tpu_custom_call.1} parent=0
    _
  %s5 = ssub.s32 1, %s3
  %s6 = scalar_select 0, %s5, %s3
  $region1: #{tpu_custom_call.1} parent=0
    #allocation2 [shape = 'u8[24576]{0}', space=vmem, size = 0x6000, scoped, tag = 'input window, operand 0, single buffered']
    #allocation3 [shape = 's32[1]{0}', space=sflag, size = 0x4, scoped, tag = 'scoped memory for tpu_custom_call.1']
    #allocation4 [shape = 's32[1]{0}', space=sflag, size = 0x4, scoped, tag = 'scoped memory for tpu_custom_call.1']
    #allocation5 [shape = 'u8[884736]{0}', space=vmem, size = 0xd8000, scoped, tag = 'input window, operand 1, single buffered']
    #allocation6 [shape = 's32[1]{0}', space=sflag, size = 0x4, scoped, tag = 'scoped memory for tpu_custom_call.1']
    #allocation7 [shape = 'u8[24576]{0}', space=vmem, size = 0x6000, scoped, tag = 'output window, operand 0, single buffered']
    %7 = vsyncpa [#allocation3], 0
    %8 = vsyncpa [#allocation6], 0
    %9 = vsyncpa [#allocation4], 0
    // Predicated region
    $region2: #{tpu_custom_call.1} parent=1 // pred_check
      _
    $region3: #{tpu_custom_call.1} parent=1 // pred_check_branch
      %11 = sbr.rel (0) target = $region5
    $region4: #{tpu_custom_call.1} parent=1 // pred_region
      %13 = vsyncadd [#allocation3], 0
      %s14 = sshll.u32 %s0, 4
      %s15 = int_to_ptr.hbm [resolvable:$true] %s14
      %s16 = sshll.u32 [#allocation2], 4
      %s17 = int_to_ptr.vmem [resolvable:$true] %s16
      %22 = dma.hbm_to_vmem [thread:$0]  %s15, 768, %s17, [#allocation3], 384, 384, 24
    $region5: #{tpu_custom_call.1} parent=1 // pred_fallthru
      _
    // Predicated region
    $region6: #{tpu_custom_call.1} parent=1 // pred_check
      _
    $region7: #{tpu_custom_call.1} parent=1 // pred_check_branch
      %24 = sbr.rel (0) target = $region9
    $region8: #{tpu_custom_call.1} parent=1 // pred_region
      %26 = vsyncadd [#allocation6], 0
      %s27 = sshll.u32 %s1, 4
      %s28 = int_to_ptr.hbm [resolvable:$true] %s27
      %s29 = sshll.u32 [#allocation5], 4
      %s30 = int_to_ptr.vmem [resolvable:$true] %s29
      %35 = dma.hbm_to_vmem [thread:$0]  %s28, 27648, %s30, [#allocation6], 576, 576, 36
    $region9: #{tpu_custom_call.1} parent=1 // pred_fallthru
      _
    // Predicated region
    $region10: #{tpu_custom_call.1} parent=1 // pred_check
      _
    $region11: #{tpu_custom_call.1} parent=1 // pred_check_branch
      %37 = sbr.rel (0) target = $region13
    $region12: #{tpu_custom_call.1} parent=1 // pred_region
      %39 = dma.done [#allocation3], 768
    $region13: #{tpu_custom_call.1} parent=1 // pred_fallthru
      _
    // Predicated region
    $region14: #{tpu_custom_call.1} parent=1 // pred_check
      _
    $region15: #{tpu_custom_call.1} parent=1 // pred_check_branch
      %41 = sbr.rel (0) target = $region17
    $region16: #{tpu_custom_call.1} parent=1 // pred_region
      %43 = dma.done [#allocation6], 27648
    $region17: #{tpu_custom_call.1} parent=1 // pred_fallthru
      _
    %v44 = vld [vmem:[#allocation2] sm:$0xff]
    %v45 = vld [vmem:[#allocation2 + $0x8] sm:$0xff]
    %v46 = vld [vmem:[#allocation2 + $0x10] sm:$0xff]
    %v47 = vld [vmem:[#allocation2 + $0x18] sm:$0xff]
    %v48 = vld [vmem:[#allocation2 + $0x20] sm:$0xff]
    %v49 = vld [vmem:[#allocation2 + $0x28] sm:$0xff]
    %v50 = vpack.c.bf16 %v47, %v44
    %v51 = vpack.c.bf16 %v48, %v45
    %v52 = vpack.c.bf16 %v49, %v46
    %v53 = vld [vmem:[#allocation5] sm:$0xff]
    %v54 = vld [vmem:[#allocation5 + $0x8] sm:$0xff]
    %v55 = vld [vmem:[#allocation5 + $0x10] sm:$0xff]
    %v56 = vld [vmem:[#allocation5 + $0x18] sm:$0xff]
    %v57 = vld [vmem:[#allocation5 + $0x20] sm:$0xf]
    %v58 = vld [vmem:[#allocation5 + $0x24] sm:$0xff]
    %v59 = vld [vmem:[#allocation5 + $0x2c] sm:$0xff]
    %v60 = vld [vmem:[#allocation5 + $0x34] sm:$0xff]
    %v61 = vld [vmem:[#allocation5 + $0x3c] sm:$0xff]
    %v62 = vld [vmem:[#allocation5 + $0x44] sm:$0xf]
    %v63 = vld [vmem:[#allocation5 + $0x48] sm:$0xff]
    %v64 = vld [vmem:[#allocation5 + $0x50] sm:$0xff]
    %v65 = vld [vmem:[#allocation5 + $0x58] sm:$0xff]
    %v66 = vld [vmem:[#allocation5 + $0x60] sm:$0xff]
    %v67 = vld [vmem:[#allocation5 + $0x68] sm:$0xf]
    %v68 = vld [vmem:[#allocation5 + $0x6c] sm:$0xff]
    %v69 = vld [vmem:[#allocation5 + $0x74] sm:$0xff]
    %v70 = vld [vmem:[#allocation5 + $0x7c] sm:$0xff]
    %v71 = vld [vmem:[#allocation5 + $0x84] sm:$0xff]
    %v72 = vld [vmem:[#allocation5 + $0x8c] sm:$0xf]
    %v73 = vld [vmem:[#allocation5 + $0x90] sm:$0xff]
    %v74 = vld [vmem:[#allocation5 + $0x98] sm:$0xff]
    %v75 = vld [vmem:[#allocation5 + $0xa0] sm:$0xff]
    %v76 = vld [vmem:[#allocation5 + $0xa8] sm:$0xff]
    %v77 = vld [vmem:[#allocation5 + $0xb0] sm:$0xf]
    %v78 = vld [vmem:[#allocation5 + $0xb4] sm:$0xff]
    %v79 = vld [vmem:[#allocation5 + $0xbc] sm:$0xff]
    %v80 = vld [vmem:[#allocation5 + $0xc4] sm:$0xff]
    %v81 = vld [vmem:[#allocation5 + $0xcc] sm:$0xff]
    %v82 = vld [vmem:[#allocation5 + $0xd4] sm:$0xf]
    %v83 = vld [vmem:[#allocation5 + $0xd8] sm:$0xff]
    %v84 = vld [vmem:[#allocation5 + $0xe0] sm:$0xff]
    %v85 = vld [vmem:[#allocation5 + $0xe8] sm:$0xff]
    %v86 = vld [vmem:[#allocation5 + $0xf0] sm:$0xff]
    %v87 = vld [vmem:[#allocation5 + $0xf8] sm:$0xf]
    %v88 = vld [vmem:[#allocation5 + $0xfc] sm:$0xff]
    %v89 = vld [vmem:[#allocation5 + $0x104] sm:$0xff]
    %v90 = vld [vmem:[#allocation5 + $0x10c] sm:$0xff]
    %v91 = vld [vmem:[#allocation5 + $0x114] sm:$0xff]
    %v92 = vld [vmem:[#allocation5 + $0x11c] sm:$0xf]
    %v93 = vld [vmem:[#allocation5 + $0x120] sm:$0xff]
    %v94 = vld [vmem:[#allocation5 + $0x128] sm:$0xff]
    %v95 = vld [vmem:[#allocation5 + $0x130] sm:$0xff]
    %v96 = vld [vmem:[#allocation5 + $0x138] sm:$0xff]
    %v97 = vld [vmem:[#allocation5 + $0x140] sm:$0xf]
    %v98 = vld [vmem:[#allocation5 + $0x144] sm:$0xff]
    %v99 = vld [vmem:[#allocation5 + $0x14c] sm:$0xff]
    %v100 = vld [vmem:[#allocation5 + $0x154] sm:$0xff]
    %v101 = vld [vmem:[#allocation5 + $0x15c] sm:$0xff]
    %v102 = vld [vmem:[#allocation5 + $0x164] sm:$0xf]
    %v103 = vld [vmem:[#allocation5 + $0x168] sm:$0xff]
    %v104 = vld [vmem:[#allocation5 + $0x170] sm:$0xff]
    %v105 = vld [vmem:[#allocation5 + $0x178] sm:$0xff]
    %v106 = vld [vmem:[#allocation5 + $0x180] sm:$0xff]
    %v107 = vld [vmem:[#allocation5 + $0x188] sm:$0xf]
    %v108 = vld [vmem:[#allocation5 + $0x18c] sm:$0xff]
    %v109 = vld [vmem:[#allocation5 + $0x194] sm:$0xff]
    %v110 = vld [vmem:[#allocation5 + $0x19c] sm:$0xff]
    %v111 = vld [vmem:[#allocation5 + $0x1a4] sm:$0xff]
    %v112 = vld [vmem:[#allocation5 + $0x1ac] sm:$0xf]
    %v113 = vld [vmem:[#allocation5 + $0x1b0] sm:$0xff]
    %v114 = vld [vmem:[#allocation5 + $0x1b8] sm:$0xff]
    %v115 = vld [vmem:[#allocation5 + $0x1c0] sm:$0xff]
    %v116 = vld [vmem:[#allocation5 + $0x1c8] sm:$0xff]
    %v117 = vld [vmem:[#allocation5 + $0x1d0] sm:$0xf]
    %v118 = vld [vmem:[#allocation5 + $0x1d4] sm:$0xff]
    %v119 = vld [vmem:[#allocation5 + $0x1dc] sm:$0xff]
    %v120 = vld [vmem:[#allocation5 + $0x1e4] sm:$0xff]
    %v121 = vld [vmem:[#allocation5 + $0x1ec] sm:$0xff]
    %v122 = vld [vmem:[#allocation5 + $0x1f4] sm:$0xf]
    %v123 = vld [vmem:[#allocation5 + $0x1f8] sm:$0xff]
    %v124 = vld [vmem:[#allocation5 + $0x200] sm:$0xff]
    %v125 = vld [vmem:[#allocation5 + $0x208] sm:$0xff]
    %v126 = vld [vmem:[#allocation5 + $0x210] sm:$0xff]
    %v127 = vld [vmem:[#allocation5 + $0x218] sm:$0xf]
    %v128 = vld [vmem:[#allocation5 + $0x21c] sm:$0xff]
    %v129 = vld [vmem:[#allocation5 + $0x224] sm:$0xff]
    %v130 = vld [vmem:[#allocation5 + $0x22c] sm:$0xff]
    %v131 = vld [vmem:[#allocation5 + $0x234] sm:$0xff]
    %v132 = vld [vmem:[#allocation5 + $0x23c] sm:$0xf]
    %v133 = vld [vmem:[#allocation5 + $0x240] sm:$0xff]
    %v134 = vld [vmem:[#allocation5 + $0x248] sm:$0xff]
    %v135 = vld [vmem:[#allocation5 + $0x250] sm:$0xff]
    %v136 = vld [vmem:[#allocation5 + $0x258] sm:$0xff]
    %v137 = vld [vmem:[#allocation5 + $0x260] sm:$0xf]
    %v138 = vld [vmem:[#allocation5 + $0x264] sm:$0xff]
    %v139 = vld [vmem:[#allocation5 + $0x26c] sm:$0xff]
    %v140 = vld [vmem:[#allocation5 + $0x274] sm:$0xff]
    %v141 = vld [vmem:[#allocation5 + $0x27c] sm:$0xff]
    %v142 = vld [vmem:[#allocation5 + $0x284] sm:$0xf]
    %v143 = vld [vmem:[#allocation5 + $0x288] sm:$0xff]
    %v144 = vld [vmem:[#allocation5 + $0x290] sm:$0xff]
    %v145 = vld [vmem:[#allocation5 + $0x298] sm:$0xff]
    %v146 = vld [vmem:[#allocation5 + $0x2a0] sm:$0xff]
    %v147 = vld [vmem:[#allocation5 + $0x2a8] sm:$0xf]
    %v148 = vld [vmem:[#allocation5 + $0x2ac] sm:$0xff]
    %v149 = vld [vmem:[#allocation5 + $0x2b4] sm:$0xff]
    %v150 = vld [vmem:[#allocation5 + $0x2bc] sm:$0xff]
    %v151 = vld [vmem:[#allocation5 + $0x2c4] sm:$0xff]
    %v152 = vld [vmem:[#allocation5 + $0x2cc] sm:$0xf]
    %v153 = vld [vmem:[#allocation5 + $0x2d0] sm:$0xff]
    %v154 = vld [vmem:[#allocation5 + $0x2d8] sm:$0xff]
    %v155 = vld [vmem:[#allocation5 + $0x2e0] sm:$0xff]
    %v156 = vld [vmem:[#allocation5 + $0x2e8] sm:$0xff]
    %v157 = vld [vmem:[#allocation5 + $0x2f0] sm:$0xf]
    %v158 = vld [vmem:[#allocation5 + $0x2f4] sm:$0xff]
    %v159 = vld [vmem:[#allocation5 + $0x2fc] sm:$0xff]
    %v160 = vld [vmem:[#allocation5 + $0x304] sm:$0xff]
    %v161 = vld [vmem:[#allocation5 + $0x30c] sm:$0xff]
    %v162 = vld [vmem:[#allocation5 + $0x314] sm:$0xf]
    %v163 = vld [vmem:[#allocation5 + $0x318] sm:$0xff]
    %v164 = vld [vmem:[#allocation5 + $0x320] sm:$0xff]
    %v165 = vld [vmem:[#allocation5 + $0x328] sm:$0xff]
    %v166 = vld [vmem:[#allocation5 + $0x330] sm:$0xff]
    %v167 = vld [vmem:[#allocation5 + $0x338] sm:$0xf]
    %v168 = vld [vmem:[#allocation5 + $0x33c] sm:$0xff]
    %v169 = vld [vmem:[#allocation5 + $0x344] sm:$0xff]
    %v170 = vld [vmem:[#allocation5 + $0x34c] sm:$0xff]
    %v171 = vld [vmem:[#allocation5 + $0x354] sm:$0xff]
    %v172 = vld [vmem:[#allocation5 + $0x35c] sm:$0xf]
    %v173 = vld [vmem:[#allocation5 + $0x360] sm:$0xff]
    %v174 = vld [vmem:[#allocation5 + $0x368] sm:$0xff]
    %v175 = vld [vmem:[#allocation5 + $0x370] sm:$0xff]
    %v176 = vld [vmem:[#allocation5 + $0x378] sm:$0xff]
    %v177 = vld [vmem:[#allocation5 + $0x380] sm:$0xf]
    %v178 = vld [vmem:[#allocation5 + $0x384] sm:$0xff]
    %v179 = vld [vmem:[#allocation5 + $0x38c] sm:$0xff]
    %v180 = vld [vmem:[#allocation5 + $0x394] sm:$0xff]
    %v181 = vld [vmem:[#allocation5 + $0x39c] sm:$0xff]
    %v182 = vld [vmem:[#allocation5 + $0x3a4] sm:$0xf]
    %v183 = vld [vmem:[#allocation5 + $0x3a8] sm:$0xff]
    %v184 = vld [vmem:[#allocation5 + $0x3b0] sm:$0xff]
    %v185 = vld [vmem:[#allocation5 + $0x3b8] sm:$0xff]
    %v186 = vld [vmem:[#allocation5 + $0x3c0] sm:$0xff]
    %v187 = vld [vmem:[#allocation5 + $0x3c8] sm:$0xf]
    %v188 = vld [vmem:[#allocation5 + $0x3cc] sm:$0xff]
    %v189 = vld [vmem:[#allocation5 + $0x3d4] sm:$0xff]
    %v190 = vld [vmem:[#allocation5 + $0x3dc] sm:$0xff]
    %v191 = vld [vmem:[#allocation5 + $0x3e4] sm:$0xff]
    %v192 = vld [vmem:[#allocation5 + $0x3ec] sm:$0xf]
    %v193 = vld [vmem:[#allocation5 + $0x3f0] sm:$0xff]
    %v194 = vld [vmem:[#allocation5 + $0x3f8] sm:$0xff]
    %v195 = vld [vmem:[#allocation5 + $0x400] sm:$0xff]
    %v196 = vld [vmem:[#allocation5 + $0x408] sm:$0xff]
    %v197 = vld [vmem:[#allocation5 + $0x410] sm:$0xf]
    %v198 = vld [vmem:[#allocation5 + $0x414] sm:$0xff]
    %v199 = vld [vmem:[#allocation5 + $0x41c] sm:$0xff]
    %v200 = vld [vmem:[#allocation5 + $0x424] sm:$0xff]
    %v201 = vld [vmem:[#allocation5 + $0x42c] sm:$0xff]
    %v202 = vld [vmem:[#allocation5 + $0x434] sm:$0xf]
    %v203 = vld [vmem:[#allocation5 + $0x438] sm:$0xff]
    %v204 = vld [vmem:[#allocation5 + $0x440] sm:$0xff]
    %v205 = vld [vmem:[#allocation5 + $0x448] sm:$0xff]
    %v206 = vld [vmem:[#allocation5 + $0x450] sm:$0xff]
    %v207 = vld [vmem:[#allocation5 + $0x458] sm:$0xf]
    %v208 = vld [vmem:[#allocation5 + $0x45c] sm:$0xff]
    %v209 = vld [vmem:[#allocation5 + $0x464] sm:$0xff]
    %v210 = vld [vmem:[#allocation5 + $0x46c] sm:$0xff]
    %v211 = vld [vmem:[#allocation5 + $0x474] sm:$0xff]
    %v212 = vld [vmem:[#allocation5 + $0x47c] sm:$0xf]
    %v213 = vld [vmem:[#allocation5 + $0x480] sm:$0xff]
    %v214 = vld [vmem:[#allocation5 + $0x488] sm:$0xff]
    %v215 = vld [vmem:[#allocation5 + $0x490] sm:$0xff]
    %v216 = vld [vmem:[#allocation5 + $0x498] sm:$0xff]
    %v217 = vld [vmem:[#allocation5 + $0x4a0] sm:$0xf]
    %v218 = vld [vmem:[#allocation5 + $0x4a4] sm:$0xff]
    %v219 = vld [vmem:[#allocation5 + $0x4ac] sm:$0xff]
    %v220 = vld [vmem:[#allocation5 + $0x4b4] sm:$0xff]
    %v221 = vld [vmem:[#allocation5 + $0x4bc] sm:$0xff]
    %v222 = vld [vmem:[#allocation5 + $0x4c4] sm:$0xf]
    %v223 = vld [vmem:[#allocation5 + $0x4c8] sm:$0xff]
    %v224 = vld [vmem:[#allocation5 + $0x4d0] sm:$0xff]
    %v225 = vld [vmem:[#allocation5 + $0x4d8] sm:$0xff]
    %v226 = vld [vmem:[#allocation5 + $0x4e0] sm:$0xff]
    %v227 = vld [vmem:[#allocation5 + $0x4e8] sm:$0xf]
    %v228 = vld [vmem:[#allocation5 + $0x4ec] sm:$0xff]
    %v229 = vld [vmem:[#allocation5 + $0x4f4] sm:$0xff]
    %v230 = vld [vmem:[#allocation5 + $0x4fc] sm:$0xff]
    %v231 = vld [vmem:[#allocation5 + $0x504] sm:$0xff]
    %v232 = vld [vmem:[#allocation5 + $0x50c] sm:$0xf]
    %v233 = vld [vmem:[#allocation5 + $0x510] sm:$0xff]
    %v234 = vld [vmem:[#allocation5 + $0x518] sm:$0xff]
    %v235 = vld [vmem:[#allocation5 + $0x520] sm:$0xff]
    %v236 = vld [vmem:[#allocation5 + $0x528] sm:$0xff]
    %v237 = vld [vmem:[#allocation5 + $0x530] sm:$0xf]
    %v238 = vld [vmem:[#allocation5 + $0x534] sm:$0xff]
    %v239 = vld [vmem:[#allocation5 + $0x53c] sm:$0xff]
    %v240 = vld [vmem:[#allocation5 + $0x544] sm:$0xff]
    %v241 = vld [vmem:[#allocation5 + $0x54c] sm:$0xff]
    %v242 = vld [vmem:[#allocation5 + $0x554] sm:$0xf]
    %v243 = vld [vmem:[#allocation5 + $0x558] sm:$0xff]
    %v244 = vld [vmem:[#allocation5 + $0x560] sm:$0xff]
    %v245 = vld [vmem:[#allocation5 + $0x568] sm:$0xff]
    %v246 = vld [vmem:[#allocation5 + $0x570] sm:$0xff]
    %v247 = vld [vmem:[#allocation5 + $0x578] sm:$0xf]
    %v248 = vld [vmem:[#allocation5 + $0x57c] sm:$0xff]
    %v249 = vld [vmem:[#allocation5 + $0x584] sm:$0xff]
    %v250 = vld [vmem:[#allocation5 + $0x58c] sm:$0xff]
    %v251 = vld [vmem:[#allocation5 + $0x594] sm:$0xff]
    %v252 = vld [vmem:[#allocation5 + $0x59c] sm:$0xf]
    %v253 = vld [vmem:[#allocation5 + $0x5a0] sm:$0xff]
    %v254 = vld [vmem:[#allocation5 + $0x5a8] sm:$0xff]
    %v255 = vld [vmem:[#allocation5 + $0x5b0] sm:$0xff]
    %v256 = vld [vmem:[#allocation5 + $0x5b8] sm:$0xff]
    %v257 = vld [vmem:[#allocation5 + $0x5c0] sm:$0xf]
    %v258 = vld [vmem:[#allocation5 + $0x5c4] sm:$0xff]
    %v259 = vld [vmem:[#allocation5 + $0x5cc] sm:$0xff]
    %v260 = vld [vmem:[#allocation5 + $0x5d4] sm:$0xff]
    %v261 = vld [vmem:[#allocation5 + $0x5dc] sm:$0xff]
    %v262 = vld [vmem:[#allocation5 + $0x5e4] sm:$0xf]
    %v263 = vld [vmem:[#allocation5 + $0x5e8] sm:$0xff]
    %v264 = vld [vmem:[#allocation5 + $0x5f0] sm:$0xff]
    %v265 = vld [vmem:[#allocation5 + $0x5f8] sm:$0xff]
    %v266 = vld [vmem:[#allocation5 + $0x600] sm:$0xff]
    %v267 = vld [vmem:[#allocation5 + $0x608] sm:$0xf]
    %v268 = vld [vmem:[#allocation5 + $0x60c] sm:$0xff]
    %v269 = vld [vmem:[#allocation5 + $0x614] sm:$0xff]
    %v270 = vld [vmem:[#allocation5 + $0x61c] sm:$0xff]
    %v271 = vld [vmem:[#allocation5 + $0x624] sm:$0xff]
    %v272 = vld [vmem:[#allocation5 + $0x62c] sm:$0xf]
    %v273 = vld [vmem:[#allocation5 + $0x630] sm:$0xff]
    %v274 = vld [vmem:[#allocation5 + $0x638] sm:$0xff]
    %v275 = vld [vmem:[#allocation5 + $0x640] sm:$0xff]
    %v276 = vld [vmem:[#allocation5 + $0x648] sm:$0xff]
    %v277 = vld [vmem:[#allocation5 + $0x650] sm:$0xf]
    %v278 = vld [vmem:[#allocation5 + $0x654] sm:$0xff]
    %v279 = vld [vmem:[#allocation5 + $0x65c] sm:$0xff]
    %v280 = vld [vmem:[#allocation5 + $0x664] sm:$0xff]
    %v281 = vld [vmem:[#allocation5 + $0x66c] sm:$0xff]
    %v282 = vld [vmem:[#allocation5 + $0x674] sm:$0xf]
    %v283 = vld [vmem:[#allocation5 + $0x678] sm:$0xff]
    %v284 = vld [vmem:[#allocation5 + $0x680] sm:$0xff]
    %v285 = vld [vmem:[#allocation5 + $0x688] sm:$0xff]
    %v286 = vld [vmem:[#allocation5 + $0x690] sm:$0xff]
    %v287 = vld [vmem:[#allocation5 + $0x698] sm:$0xf]
    %v288 = vld [vmem:[#allocation5 + $0x69c] sm:$0xff]
    %v289 = vld [vmem:[#allocation5 + $0x6a4] sm:$0xff]
    %v290 = vld [vmem:[#allocation5 + $0x6ac] sm:$0xff]
    %v291 = vld [vmem:[#allocation5 + $0x6b4] sm:$0xff]
    %v292 = vld [vmem:[#allocation5 + $0x6bc] sm:$0xf]
    %v533 = vunpack.c.l.b16 %v53
    %v534 = vunpack.c.h.b16 %v53
    %v535 = vunpack.c.l.b16 %v54
    %v536 = vunpack.c.h.b16 %v54
    %v537 = vunpack.c.l.b16 %v55
    %v538 = vunpack.c.h.b16 %v55
    %v539 = vunpack.c.l.b16 %v56
    %v540 = vunpack.c.h.b16 %v56
    %v541 = vunpack.c.l.b16 %v57
    %v542 = vunpack.c.l.b16 %v58
    %v543 = vunpack.c.h.b16 %v58
    %v544 = vunpack.c.l.b16 %v59
    %v545 = vunpack.c.h.b16 %v59
    %v546 = vunpack.c.l.b16 %v60
    %v547 = vunpack.c.h.b16 %v60
    %v548 = vunpack.c.l.b16 %v61
    %v549 = vunpack.c.h.b16 %v61
    %v550 = vunpack.c.l.b16 %v62
    %v551 = vunpack.c.l.b16 %v63
    %v552 = vunpack.c.h.b16 %v63
    %v553 = vunpack.c.l.b16 %v64
    %v554 = vunpack.c.h.b16 %v64
    %v555 = vunpack.c.l.b16 %v65
    %v556 = vunpack.c.h.b16 %v65
    %v557 = vunpack.c.l.b16 %v66
    %v558 = vunpack.c.h.b16 %v66
    %v559 = vunpack.c.l.b16 %v67
    %v560 = vunpack.c.l.b16 %v68
    %v561 = vunpack.c.h.b16 %v68
    %v562 = vunpack.c.l.b16 %v69
    %v563 = vunpack.c.h.b16 %v69
    %v564 = vunpack.c.l.b16 %v70
    %v565 = vunpack.c.h.b16 %v70
    %v566 = vunpack.c.l.b16 %v71
    %v567 = vunpack.c.h.b16 %v71
    %v568 = vunpack.c.l.b16 %v72
    %v569 = vunpack.c.l.b16 %v73
    %v570 = vunpack.c.h.b16 %v73
    %v571 = vunpack.c.l.b16 %v74
    %v572 = vunpack.c.h.b16 %v74
    %v573 = vunpack.c.l.b16 %v75
    %v574 = vunpack.c.h.b16 %v75
    %v575 = vunpack.c.l.b16 %v76
    %v576 = vunpack.c.h.b16 %v76
    %v577 = vunpack.c.l.b16 %v77
    %v578 = vunpack.c.l.b16 %v78
    %v579 = vunpack.c.h.b16 %v78
    %v580 = vunpack.c.l.b16 %v79
    %v581 = vunpack.c.h.b16 %v79
    %v582 = vunpack.c.l.b16 %v80
    %v583 = vunpack.c.h.b16 %v80
    %v584 = vunpack.c.l.b16 %v81
    %v585 = vunpack.c.h.b16 %v81
    %v586 = vunpack.c.l.b16 %v82
    %v587 = vunpack.c.l.b16 %v83
    %v588 = vunpack.c.h.b16 %v83
    %v589 = vunpack.c.l.b16 %v84
    %v590 = vunpack.c.h.b16 %v84
    %v591 = vunpack.c.l.b16 %v85
    %v592 = vunpack.c.h.b16 %v85
    %v593 = vunpack.c.l.b16 %v86
    %v594 = vunpack.c.h.b16 %v86
    %v595 = vunpack.c.l.b16 %v87
    %v596 = vunpack.c.l.b16 %v88
    %v597 = vunpack.c.h.b16 %v88
    %v598 = vunpack.c.l.b16 %v89
    %v599 = vunpack.c.h.b16 %v89
    %v600 = vunpack.c.l.b16 %v90
    %v601 = vunpack.c.h.b16 %v90
    %v602 = vunpack.c.l.b16 %v91
    %v603 = vunpack.c.h.b16 %v91
    %v604 = vunpack.c.l.b16 %v92
    %v605 = vunpack.c.l.b16 %v93
    %v606 = vunpack.c.h.b16 %v93
    %v607 = vunpack.c.l.b16 %v94
    %v608 = vunpack.c.h.b16 %v94
    %v609 = vunpack.c.l.b16 %v95
    %v610 = vunpack.c.h.b16 %v95
    %v611 = vunpack.c.l.b16 %v96
    %v612 = vunpack.c.h.b16 %v96
    %v613 = vunpack.c.l.b16 %v97
    %v614 = vunpack.c.l.b16 %v98
    %v615 = vunpack.c.h.b16 %v98
    %v616 = vunpack.c.l.b16 %v99
    %v617 = vunpack.c.h.b16 %v99
    %v618 = vunpack.c.l.b16 %v100
    %v619 = vunpack.c.h.b16 %v100
    %v620 = vunpack.c.l.b16 %v101
    %v621 = vunpack.c.h.b16 %v101
    %v622 = vunpack.c.l.b16 %v102
    %v623 = vunpack.c.l.b16 %v103
    %v624 = vunpack.c.h.b16 %v103
    %v625 = vunpack.c.l.b16 %v104
    %v626 = vunpack.c.h.b16 %v104
    %v627 = vunpack.c.l.b16 %v105
    %v628 = vunpack.c.h.b16 %v105
    %v629 = vunpack.c.l.b16 %v106
    %v630 = vunpack.c.h.b16 %v106
    %v631 = vunpack.c.l.b16 %v107
    %v632 = vunpack.c.l.b16 %v108
    %v633 = vunpack.c.h.b16 %v108
    %v634 = vunpack.c.l.b16 %v109
    %v635 = vunpack.c.h.b16 %v109
    %v636 = vunpack.c.l.b16 %v110
    %v637 = vunpack.c.h.b16 %v110
    %v638 = vunpack.c.l.b16 %v111
    %v639 = vunpack.c.h.b16 %v111
    %v640 = vunpack.c.l.b16 %v112
    %v641 = vunpack.c.l.b16 %v113
    %v642 = vunpack.c.h.b16 %v113
    %v643 = vunpack.c.l.b16 %v114
    %v644 = vunpack.c.h.b16 %v114
    %v645 = vunpack.c.l.b16 %v115
    %v646 = vunpack.c.h.b16 %v115
    %v647 = vunpack.c.l.b16 %v116
    %v648 = vunpack.c.h.b16 %v116
    %v649 = vunpack.c.l.b16 %v117
    %v650 = vunpack.c.l.b16 %v118
    %v651 = vunpack.c.h.b16 %v118
    %v652 = vunpack.c.l.b16 %v119
    %v653 = vunpack.c.h.b16 %v119
    %v654 = vunpack.c.l.b16 %v120
    %v655 = vunpack.c.h.b16 %v120
    %v656 = vunpack.c.l.b16 %v121
    %v657 = vunpack.c.h.b16 %v121
    %v658 = vunpack.c.l.b16 %v122
    %v659 = vunpack.c.l.b16 %v123
    %v660 = vunpack.c.h.b16 %v123
    %v661 = vunpack.c.l.b16 %v124
    %v662 = vunpack.c.h.b16 %v124
    %v663 = vunpack.c.l.b16 %v125
    %v664 = vunpack.c.h.b16 %v125
    %v665 = vunpack.c.l.b16 %v126
    %v666 = vunpack.c.h.b16 %v126
    %v667 = vunpack.c.l.b16 %v127
    %v668 = vunpack.c.l.b16 %v128
    %v669 = vunpack.c.h.b16 %v128
    %v670 = vunpack.c.l.b16 %v129
    %v671 = vunpack.c.h.b16 %v129
    %v672 = vunpack.c.l.b16 %v130
    %v673 = vunpack.c.h.b16 %v130
    %v674 = vunpack.c.l.b16 %v131
    %v675 = vunpack.c.h.b16 %v131
    %v676 = vunpack.c.l.b16 %v132
    %v677 = vunpack.c.l.b16 %v133
    %v678 = vunpack.c.h.b16 %v133
    %v679 = vunpack.c.l.b16 %v134
    %v680 = vunpack.c.h.b16 %v134
    %v681 = vunpack.c.l.b16 %v135
    %v682 = vunpack.c.h.b16 %v135
    %v683 = vunpack.c.l.b16 %v136
    %v684 = vunpack.c.h.b16 %v136
    %v685 = vunpack.c.l.b16 %v137
    %v686 = vunpack.c.l.b16 %v138
    %v687 = vunpack.c.h.b16 %v138
    %v688 = vunpack.c.l.b16 %v139
    %v689 = vunpack.c.h.b16 %v139
    %v690 = vunpack.c.l.b16 %v140
    %v691 = vunpack.c.h.b16 %v140
    %v692 = vunpack.c.l.b16 %v141
    %v693 = vunpack.c.h.b16 %v141
    %v694 = vunpack.c.l.b16 %v142
    %v695 = vunpack.c.l.b16 %v143
    %v696 = vunpack.c.h.b16 %v143
    %v697 = vunpack.c.l.b16 %v144
    %v698 = vunpack.c.h.b16 %v144
    %v699 = vunpack.c.l.b16 %v145
    %v700 = vunpack.c.h.b16 %v145
    %v701 = vunpack.c.l.b16 %v146
    %v702 = vunpack.c.h.b16 %v146
    %v703 = vunpack.c.l.b16 %v147
    %v704 = vunpack.c.l.b16 %v148
    %v705 = vunpack.c.h.b16 %v148
    %v706 = vunpack.c.l.b16 %v149
    %v707 = vunpack.c.h.b16 %v149
    %v708 = vunpack.c.l.b16 %v150
    %v709 = vunpack.c.h.b16 %v150
    %v710 = vunpack.c.l.b16 %v151
    %v711 = vunpack.c.h.b16 %v151
    %v712 = vunpack.c.l.b16 %v152
    %v713 = vunpack.c.l.b16 %v153
    %v714 = vunpack.c.h.b16 %v153
    %v715 = vunpack.c.l.b16 %v154
    %v716 = vunpack.c.h.b16 %v154
    %v717 = vunpack.c.l.b16 %v155
    %v718 = vunpack.c.h.b16 %v155
    %v719 = vunpack.c.l.b16 %v156
    %v720 = vunpack.c.h.b16 %v156
    %v721 = vunpack.c.l.b16 %v157
    %v722 = vunpack.c.l.b16 %v158
    %v723 = vunpack.c.h.b16 %v158
    %v724 = vunpack.c.l.b16 %v159
    %v725 = vunpack.c.h.b16 %v159
    %v726 = vunpack.c.l.b16 %v160
    %v727 = vunpack.c.h.b16 %v160
    %v728 = vunpack.c.l.b16 %v161
    %v729 = vunpack.c.h.b16 %v161
    %v730 = vunpack.c.l.b16 %v162
    %v731 = vunpack.c.l.b16 %v163
    %v732 = vunpack.c.h.b16 %v163
    %v733 = vunpack.c.l.b16 %v164
    %v734 = vunpack.c.h.b16 %v164
    %v735 = vunpack.c.l.b16 %v165
    %v736 = vunpack.c.h.b16 %v165
    %v737 = vunpack.c.l.b16 %v166
    %v738 = vunpack.c.h.b16 %v166
    %v739 = vunpack.c.l.b16 %v167
    %v740 = vunpack.c.l.b16 %v168
    %v741 = vunpack.c.h.b16 %v168
    %v742 = vunpack.c.l.b16 %v169
    %v743 = vunpack.c.h.b16 %v169
    %v744 = vunpack.c.l.b16 %v170
    %v745 = vunpack.c.h.b16 %v170
    %v746 = vunpack.c.l.b16 %v171
    %v747 = vunpack.c.h.b16 %v171
    %v748 = vunpack.c.l.b16 %v172
    %v749 = vunpack.c.l.b16 %v173
    %v750 = vunpack.c.h.b16 %v173
    %v751 = vunpack.c.l.b16 %v174
    %v752 = vunpack.c.h.b16 %v174
    %v753 = vunpack.c.l.b16 %v175
    %v754 = vunpack.c.h.b16 %v175
    %v755 = vunpack.c.l.b16 %v176
    %v756 = vunpack.c.h.b16 %v176
    %v757 = vunpack.c.l.b16 %v177
    %v758 = vunpack.c.l.b16 %v178
    %v759 = vunpack.c.h.b16 %v178
    %v760 = vunpack.c.l.b16 %v179
    %v761 = vunpack.c.h.b16 %v179
    %v762 = vunpack.c.l.b16 %v180
    %v763 = vunpack.c.h.b16 %v180
    %v764 = vunpack.c.l.b16 %v181
    %v765 = vunpack.c.h.b16 %v181
    %v766 = vunpack.c.l.b16 %v182
    %v767 = vunpack.c.l.b16 %v183
    %v768 = vunpack.c.h.b16 %v183
    %v769 = vunpack.c.l.b16 %v184
    %v770 = vunpack.c.h.b16 %v184
    %v771 = vunpack.c.l.b16 %v185
    %v772 = vunpack.c.h.b16 %v185
    %v773 = vunpack.c.l.b16 %v186
    %v774 = vunpack.c.h.b16 %v186
    %v775 = vunpack.c.l.b16 %v187
    %v776 = vunpack.c.l.b16 %v188
    %v777 = vunpack.c.h.b16 %v188
    %v778 = vunpack.c.l.b16 %v189
    %v779 = vunpack.c.h.b16 %v189
    %v780 = vunpack.c.l.b16 %v190
    %v781 = vunpack.c.h.b16 %v190
    %v782 = vunpack.c.l.b16 %v191
    %v783 = vunpack.c.h.b16 %v191
    %v784 = vunpack.c.l.b16 %v192
    %v785 = vunpack.c.l.b16 %v193
    %v786 = vunpack.c.h.b16 %v193
    %v787 = vunpack.c.l.b16 %v194
    %v788 = vunpack.c.h.b16 %v194
    %v789 = vunpack.c.l.b16 %v195
    %v790 = vunpack.c.h.b16 %v195
    %v791 = vunpack.c.l.b16 %v196
    %v792 = vunpack.c.h.b16 %v196
    %v793 = vunpack.c.l.b16 %v197
    %v794 = vunpack.c.l.b16 %v198
    %v795 = vunpack.c.h.b16 %v198
    %v796 = vunpack.c.l.b16 %v199
    %v797 = vunpack.c.h.b16 %v199
    %v798 = vunpack.c.l.b16 %v200
    %v799 = vunpack.c.h.b16 %v200
    %v800 = vunpack.c.l.b16 %v201
    %v801 = vunpack.c.h.b16 %v201
    %v802 = vunpack.c.l.b16 %v202
    %v803 = vunpack.c.l.b16 %v203
    %v804 = vunpack.c.h.b16 %v203
    %v805 = vunpack.c.l.b16 %v204
    %v806 = vunpack.c.h.b16 %v204
    %v807 = vunpack.c.l.b16 %v205
    %v808 = vunpack.c.h.b16 %v205
    %v809 = vunpack.c.l.b16 %v206
    %v810 = vunpack.c.h.b16 %v206
    %v811 = vunpack.c.l.b16 %v207
    %v812 = vunpack.c.l.b16 %v208
    %v813 = vunpack.c.h.b16 %v208
    %v814 = vunpack.c.l.b16 %v209
    %v815 = vunpack.c.h.b16 %v209
    %v816 = vunpack.c.l.b16 %v210
    %v817 = vunpack.c.h.b16 %v210
    %v818 = vunpack.c.l.b16 %v211
    %v819 = vunpack.c.h.b16 %v211
    %v820 = vunpack.c.l.b16 %v212
    %v821 = vunpack.c.l.b16 %v213
    %v822 = vunpack.c.h.b16 %v213
    %v823 = vunpack.c.l.b16 %v214
    %v824 = vunpack.c.h.b16 %v214
    %v825 = vunpack.c.l.b16 %v215
    %v826 = vunpack.c.h.b16 %v215
    %v827 = vunpack.c.l.b16 %v216
    %v828 = vunpack.c.h.b16 %v216
    %v829 = vunpack.c.l.b16 %v217
    %v830 = vunpack.c.l.b16 %v218
    %v831 = vunpack.c.h.b16 %v218
    %v832 = vunpack.c.l.b16 %v219
    %v833 = vunpack.c.h.b16 %v219
    %v834 = vunpack.c.l.b16 %v220
    %v835 = vunpack.c.h.b16 %v220
    %v836 = vunpack.c.l.b16 %v221
    %v837 = vunpack.c.h.b16 %v221
    %v838 = vunpack.c.l.b16 %v222
    %v839 = vunpack.c.l.b16 %v223
    %v840 = vunpack.c.h.b16 %v223
    %v841 = vunpack.c.l.b16 %v224
    %v842 = vunpack.c.h.b16 %v224
    %v843 = vunpack.c.l.b16 %v225
    %v844 = vunpack.c.h.b16 %v225
    %v845 = vunpack.c.l.b16 %v226
    %v846 = vunpack.c.h.b16 %v226
    %v847 = vunpack.c.l.b16 %v227
    %v848 = vunpack.c.l.b16 %v228
    %v849 = vunpack.c.h.b16 %v228
    %v850 = vunpack.c.l.b16 %v229
    %v851 = vunpack.c.h.b16 %v229
    %v852 = vunpack.c.l.b16 %v230
    %v853 = vunpack.c.h.b16 %v230
    %v854 = vunpack.c.l.b16 %v231
    %v855 = vunpack.c.h.b16 %v231
    %v856 = vunpack.c.l.b16 %v232
    %v857 = vunpack.c.l.b16 %v233
    %v858 = vunpack.c.h.b16 %v233
    %v859 = vunpack.c.l.b16 %v234
    %v860 = vunpack.c.h.b16 %v234
    %v861 = vunpack.c.l.b16 %v235
    %v862 = vunpack.c.h.b16 %v235
    %v863 = vunpack.c.l.b16 %v236
    %v864 = vunpack.c.h.b16 %v236
    %v865 = vunpack.c.l.b16 %v237
    %v866 = vunpack.c.l.b16 %v238
    %v867 = vunpack.c.h.b16 %v238
    %v868 = vunpack.c.l.b16 %v239
    %v869 = vunpack.c.h.b16 %v239
    %v870 = vunpack.c.l.b16 %v240
    %v871 = vunpack.c.h.b16 %v240
    %v872 = vunpack.c.l.b16 %v241
    %v873 = vunpack.c.h.b16 %v241
    %v874 = vunpack.c.l.b16 %v242
    %v875 = vunpack.c.l.b16 %v243
    %v876 = vunpack.c.h.b16 %v243
    %v877 = vunpack.c.l.b16 %v244
    %v878 = vunpack.c.h.b16 %v244
    %v879 = vunpack.c.l.b16 %v245
    %v880 = vunpack.c.h.b16 %v245
    %v881 = vunpack.c.l.b16 %v246
    %v882 = vunpack.c.h.b16 %v246
    %v883 = vunpack.c.l.b16 %v247
    %v884 = vunpack.c.l.b16 %v248
    %v885 = vunpack.c.h.b16 %v248
    %v886 = vunpack.c.l.b16 %v249
    %v887 = vunpack.c.h.b16 %v249
    %v888 = vunpack.c.l.b16 %v250
    %v889 = vunpack.c.h.b16 %v250
    %v890 = vunpack.c.l.b16 %v251
    %v891 = vunpack.c.h.b16 %v251
    %v892 = vunpack.c.l.b16 %v252
    %v893 = vunpack.c.l.b16 %v253
    %v894 = vunpack.c.h.b16 %v253
    %v895 = vunpack.c.l.b16 %v254
    %v896 = vunpack.c.h.b16 %v254
    %v897 = vunpack.c.l.b16 %v255
    %v898 = vunpack.c.h.b16 %v255
    %v899 = vunpack.c.l.b16 %v256
    %v900 = vunpack.c.h.b16 %v256
    %v901 = vunpack.c.l.b16 %v257
    %v902 = vunpack.c.l.b16 %v258
    %v903 = vunpack.c.h.b16 %v258
    %v904 = vunpack.c.l.b16 %v259
    %v905 = vunpack.c.h.b16 %v259
    %v906 = vunpack.c.l.b16 %v260
    %v907 = vunpack.c.h.b16 %v260
    %v908 = vunpack.c.l.b16 %v261
    %v909 = vunpack.c.h.b16 %v261
    %v910 = vunpack.c.l.b16 %v262
    %v911 = vunpack.c.l.b16 %v263
    %v912 = vunpack.c.h.b16 %v263
    %v913 = vunpack.c.l.b16 %v264
    %v914 = vunpack.c.h.b16 %v264
    %v915 = vunpack.c.l.b16 %v265
    %v916 = vunpack.c.h.b16 %v265
    %v917 = vunpack.c.l.b16 %v266
    %v918 = vunpack.c.h.b16 %v266
    %v919 = vunpack.c.l.b16 %v267
    %v920 = vunpack.c.l.b16 %v268
    %v921 = vunpack.c.h.b16 %v268
    %v922 = vunpack.c.l.b16 %v269
    %v923 = vunpack.c.h.b16 %v269
    %v924 = vunpack.c.l.b16 %v270
    %v925 = vunpack.c.h.b16 %v270
    %v926 = vunpack.c.l.b16 %v271
    %v927 = vunpack.c.h.b16 %v271
    %v928 = vunpack.c.l.b16 %v272
    %v929 = vunpack.c.l.b16 %v273
    %v930 = vunpack.c.h.b16 %v273
    %v931 = vunpack.c.l.b16 %v274
    %v932 = vunpack.c.h.b16 %v274
    %v933 = vunpack.c.l.b16 %v275
    %v934 = vunpack.c.h.b16 %v275
    %v935 = vunpack.c.l.b16 %v276
    %v936 = vunpack.c.h.b16 %v276
    %v937 = vunpack.c.l.b16 %v277
    %v938 = vunpack.c.l.b16 %v278
    %v939 = vunpack.c.h.b16 %v278
    %v940 = vunpack.c.l.b16 %v279
    %v941 = vunpack.c.h.b16 %v279
    %v942 = vunpack.c.l.b16 %v280
    %v943 = vunpack.c.h.b16 %v280
    %v944 = vunpack.c.l.b16 %v281
    %v945 = vunpack.c.h.b16 %v281
    %v946 = vunpack.c.l.b16 %v282
    %v947 = vunpack.c.l.b16 %v283
    %v948 = vunpack.c.h.b16 %v283
    %v949 = vunpack.c.l.b16 %v284
    %v950 = vunpack.c.h.b16 %v284
    %v951 = vunpack.c.l.b16 %v285
    %v952 = vunpack.c.h.b16 %v285
    %v953 = vunpack.c.l.b16 %v286
    %v954 = vunpack.c.h.b16 %v286
    %v955 = vunpack.c.l.b16 %v287
    %v956 = vunpack.c.l.b16 %v288
    %v957 = vunpack.c.h.b16 %v288
    %v958 = vunpack.c.l.b16 %v289
    %v959 = vunpack.c.h.b16 %v289
    %v960 = vunpack.c.l.b16 %v290
    %v961 = vunpack.c.h.b16 %v290
    %v962 = vunpack.c.l.b16 %v291
    %v963 = vunpack.c.h.b16 %v291
    %v964 = vunpack.c.l.b16 %v292
    %v965 = vpack.c.b16 %v542, %v533
    %v966 = vpack.c.b16 %v543, %v534
    %v967 = vpack.c.b16 %v544, %v535
    %v968 = vpack.c.b16 %v545, %v536
    %v969 = vpack.c.b16 %v546, %v537
    %v970 = vpack.c.b16 %v547, %v538
    %v971 = vpack.c.b16 %v548, %v539
    %v972 = vpack.c.b16 %v549, %v540
    %v973 = vpack.c.b16 %v550, %v541
    %v974 = vpack.c.b16 %v560, %v551
    %v975 = vpack.c.b16 %v561, %v552
    %v976 = vpack.c.b16 %v562, %v553
    %v977 = vpack.c.b16 %v563, %v554
    %v978 = vpack.c.b16 %v564, %v555
    %v979 = vpack.c.b16 %v565, %v556
    %v980 = vpack.c.b16 %v566, %v557
    %v981 = vpack.c.b16 %v567, %v558
    %v982 = vpack.c.b16 %v568, %v559
    %v983 = vpack.c.b16 %v578, %v569
    %v984 = vpack.c.b16 %v579, %v570
    %v985 = vpack.c.b16 %v580, %v571
    %v986 = vpack.c.b16 %v581, %v572
    %v987 = vpack.c.b16 %v582, %v573
    %v988 = vpack.c.b16 %v583, %v574
    %v989 = vpack.c.b16 %v584, %v575
    %v990 = vpack.c.b16 %v585, %v576
    %v991 = vpack.c.b16 %v586, %v577
    %v992 = vpack.c.b16 %v596, %v587
    %v993 = vpack.c.b16 %v597, %v588
    %v994 = vpack.c.b16 %v598, %v589
    %v995 = vpack.c.b16 %v599, %v590
    %v996 = vpack.c.b16 %v600, %v591
    %v997 = vpack.c.b16 %v601, %v592
    %v998 = vpack.c.b16 %v602, %v593
    %v999 = vpack.c.b16 %v603, %v594
    %v1000 = vpack.c.b16 %v604, %v595
    %v1001 = vpack.c.b16 %v614, %v605
    %v1002 = vpack.c.b16 %v615, %v606
    %v1003 = vpack.c.b16 %v616, %v607
    %v1004 = vpack.c.b16 %v617, %v608
    %v1005 = vpack.c.b16 %v618, %v609
    %v1006 = vpack.c.b16 %v619, %v610
    %v1007 = vpack.c.b16 %v620, %v611
    %v1008 = vpack.c.b16 %v621, %v612
    %v1009 = vpack.c.b16 %v622, %v613
    %v1010 = vpack.c.b16 %v632, %v623
    %v1011 = vpack.c.b16 %v633, %v624
    %v1012 = vpack.c.b16 %v634, %v625
    %v1013 = vpack.c.b16 %v635, %v626
    %v1014 = vpack.c.b16 %v636, %v627
    %v1015 = vpack.c.b16 %v637, %v628
    %v1016 = vpack.c.b16 %v638, %v629
    %v1017 = vpack.c.b16 %v639, %v630
    %v1018 = vpack.c.b16 %v640, %v631
    %v1019 = vpack.c.b16 %v650, %v641
    %v1020 = vpack.c.b16 %v651, %v642
    %v1021 = vpack.c.b16 %v652, %v643
    %v1022 = vpack.c.b16 %v653, %v644
    %v1023 = vpack.c.b16 %v654, %v645
    %v1024 = vpack.c.b16 %v655, %v646
    %v1025 = vpack.c.b16 %v656, %v647
    %v1026 = vpack.c.b16 %v657, %v648
    %v1027 = vpack.c.b16 %v658, %v649
    %v1028 = vpack.c.b16 %v668, %v659
    %v1029 = vpack.c.b16 %v669, %v660
    %v1030 = vpack.c.b16 %v670, %v661
    %v1031 = vpack.c.b16 %v671, %v662
    %v1032 = vpack.c.b16 %v672, %v663
    %v1033 = vpack.c.b16 %v673, %v664
    %v1034 = vpack.c.b16 %v674, %v665
    %v1035 = vpack.c.b16 %v675, %v666
    %v1036 = vpack.c.b16 %v676, %v667
    %v1037 = vpack.c.b16 %v686, %v677
    %v1038 = vpack.c.b16 %v687, %v678
    %v1039 = vpack.c.b16 %v688, %v679
    %v1040 = vpack.c.b16 %v689, %v680
    %v1041 = vpack.c.b16 %v690, %v681
    %v1042 = vpack.c.b16 %v691, %v682
    %v1043 = vpack.c.b16 %v692, %v683
    %v1044 = vpack.c.b16 %v693, %v684
    %v1045 = vpack.c.b16 %v694, %v685
    %v1046 = vpack.c.b16 %v704, %v695
    %v1047 = vpack.c.b16 %v705, %v696
    %v1048 = vpack.c.b16 %v706, %v697
    %v1049 = vpack.c.b16 %v707, %v698
    %v1050 = vpack.c.b16 %v708, %v699
    %v1051 = vpack.c.b16 %v709, %v700
    %v1052 = vpack.c.b16 %v710, %v701
    %v1053 = vpack.c.b16 %v711, %v702
    %v1054 = vpack.c.b16 %v712, %v703
    %v1055 = vpack.c.b16 %v722, %v713
    %v1056 = vpack.c.b16 %v723, %v714
    %v1057 = vpack.c.b16 %v724, %v715
    %v1058 = vpack.c.b16 %v725, %v716
    %v1059 = vpack.c.b16 %v726, %v717
    %v1060 = vpack.c.b16 %v727, %v718
    %v1061 = vpack.c.b16 %v728, %v719
    %v1062 = vpack.c.b16 %v729, %v720
    %v1063 = vpack.c.b16 %v730, %v721
    %v1064 = vpack.c.b16 %v740, %v731
    %v1065 = vpack.c.b16 %v741, %v732
    %v1066 = vpack.c.b16 %v742, %v733
    %v1067 = vpack.c.b16 %v743, %v734
    %v1068 = vpack.c.b16 %v744, %v735
    %v1069 = vpack.c.b16 %v745, %v736
    %v1070 = vpack.c.b16 %v746, %v737
    %v1071 = vpack.c.b16 %v747, %v738
    %v1072 = vpack.c.b16 %v748, %v739
    %v1073 = vpack.c.b16 %v758, %v749
    %v1074 = vpack.c.b16 %v759, %v750
    %v1075 = vpack.c.b16 %v760, %v751
    %v1076 = vpack.c.b16 %v761, %v752
    %v1077 = vpack.c.b16 %v762, %v753
    %v1078 = vpack.c.b16 %v763, %v754
    %v1079 = vpack.c.b16 %v764, %v755
    %v1080 = vpack.c.b16 %v765, %v756
    %v1081 = vpack.c.b16 %v766, %v757
    %v1082 = vpack.c.b16 %v776, %v767
    %v1083 = vpack.c.b16 %v777, %v768
    %v1084 = vpack.c.b16 %v778, %v769
    %v1085 = vpack.c.b16 %v779, %v770
    %v1086 = vpack.c.b16 %v780, %v771
    %v1087 = vpack.c.b16 %v781, %v772
    %v1088 = vpack.c.b16 %v782, %v773
    %v1089 = vpack.c.b16 %v783, %v774
    %v1090 = vpack.c.b16 %v784, %v775
    %v1091 = vpack.c.b16 %v794, %v785
    %v1092 = vpack.c.b16 %v795, %v786
    %v1093 = vpack.c.b16 %v796, %v787
    %v1094 = vpack.c.b16 %v797, %v788
    %v1095 = vpack.c.b16 %v798, %v789
    %v1096 = vpack.c.b16 %v799, %v790
    %v1097 = vpack.c.b16 %v800, %v791
    %v1098 = vpack.c.b16 %v801, %v792
    %v1099 = vpack.c.b16 %v802, %v793
    %v1100 = vpack.c.b16 %v812, %v803
    %v1101 = vpack.c.b16 %v813, %v804
    %v1102 = vpack.c.b16 %v814, %v805
    %v1103 = vpack.c.b16 %v815, %v806
    %v1104 = vpack.c.b16 %v816, %v807
    %v1105 = vpack.c.b16 %v817, %v808
    %v1106 = vpack.c.b16 %v818, %v809
    %v1107 = vpack.c.b16 %v819, %v810
    %v1108 = vpack.c.b16 %v820, %v811
    %v1109 = vpack.c.b16 %v830, %v821
    %v1110 = vpack.c.b16 %v831, %v822
    %v1111 = vpack.c.b16 %v832, %v823
    %v1112 = vpack.c.b16 %v833, %v824
    %v1113 = vpack.c.b16 %v834, %v825
    %v1114 = vpack.c.b16 %v835, %v826
    %v1115 = vpack.c.b16 %v836, %v827
    %v1116 = vpack.c.b16 %v837, %v828
    %v1117 = vpack.c.b16 %v838, %v829
    %v1118 = vpack.c.b16 %v848, %v839
    %v1119 = vpack.c.b16 %v849, %v840
    %v1120 = vpack.c.b16 %v850, %v841
    %v1121 = vpack.c.b16 %v851, %v842
    %v1122 = vpack.c.b16 %v852, %v843
    %v1123 = vpack.c.b16 %v853, %v844
    %v1124 = vpack.c.b16 %v854, %v845
    %v1125 = vpack.c.b16 %v855, %v846
    %v1126 = vpack.c.b16 %v856, %v847
    %v1127 = vpack.c.b16 %v866, %v857
    %v1128 = vpack.c.b16 %v867, %v858
    %v1129 = vpack.c.b16 %v868, %v859
    %v1130 = vpack.c.b16 %v869, %v860
    %v1131 = vpack.c.b16 %v870, %v861
    %v1132 = vpack.c.b16 %v871, %v862
    %v1133 = vpack.c.b16 %v872, %v863
    %v1134 = vpack.c.b16 %v873, %v864
    %v1135 = vpack.c.b16 %v874, %v865
    %v1136 = vpack.c.b16 %v884, %v875
    %v1137 = vpack.c.b16 %v885, %v876
    %v1138 = vpack.c.b16 %v886, %v877
    %v1139 = vpack.c.b16 %v887, %v878
    %v1140 = vpack.c.b16 %v888, %v879
    %v1141 = vpack.c.b16 %v889, %v880
    %v1142 = vpack.c.b16 %v890, %v881
    %v1143 = vpack.c.b16 %v891, %v882
    %v1144 = vpack.c.b16 %v892, %v883
    %v1145 = vpack.c.b16 %v902, %v893
    %v1146 = vpack.c.b16 %v903, %v894
    %v1147 = vpack.c.b16 %v904, %v895
    %v1148 = vpack.c.b16 %v905, %v896
    %v1149 = vpack.c.b16 %v906, %v897
    %v1150 = vpack.c.b16 %v907, %v898
    %v1151 = vpack.c.b16 %v908, %v899
    %v1152 = vpack.c.b16 %v909, %v900
    %v1153 = vpack.c.b16 %v910, %v901
    %v1154 = vpack.c.b16 %v920, %v911
    %v1155 = vpack.c.b16 %v921, %v912
    %v1156 = vpack.c.b16 %v922, %v913
    %v1157 = vpack.c.b16 %v923, %v914
    %v1158 = vpack.c.b16 %v924, %v915
    %v1159 = vpack.c.b16 %v925, %v916
    %v1160 = vpack.c.b16 %v926, %v917
    %v1161 = vpack.c.b16 %v927, %v918
    %v1162 = vpack.c.b16 %v928, %v919
    %v1163 = vpack.c.b16 %v938, %v929
    %v1164 = vpack.c.b16 %v939, %v930
    %v1165 = vpack.c.b16 %v940, %v931
    %v1166 = vpack.c.b16 %v941, %v932
    %v1167 = vpack.c.b16 %v942, %v933
    %v1168 = vpack.c.b16 %v943, %v934
    %v1169 = vpack.c.b16 %v944, %v935
    %v1170 = vpack.c.b16 %v945, %v936
    %v1171 = vpack.c.b16 %v946, %v937
    %v1172 = vpack.c.b16 %v956, %v947
    %v1173 = vpack.c.b16 %v957, %v948
    %v1174 = vpack.c.b16 %v958, %v949
    %v1175 = vpack.c.b16 %v959, %v950
    %v1176 = vpack.c.b16 %v960, %v951
    %v1177 = vpack.c.b16 %v961, %v952
    %v1178 = vpack.c.b16 %v962, %v953
    %v1179 = vpack.c.b16 %v963, %v954
    %v1180 = vpack.c.b16 %v964, %v955
    %1397 = vmatpush.bf16.msra.mxu0 %v1028
    %1398 = vmatpush.bf16.msra.mxu0 %v1019
    %1399 = vmatpush.bf16.msra.mxu0 %v1010
    %1400 = vmatpush.bf16.msra.mxu0 %v1001
    %1401 = vmatpush.bf16.msra.mxu0 %v992
    %1402 = vmatpush.bf16.msra.mxu0 %v983
    %1403 = vmatpush.bf16.msra.mxu0 %v974
    %1404 = vmatpush.bf16.msra.mxu0 %v965
    %1405 = vmatmul.bf16.gmra.mxu0 %v50
    %v1406 = vpop.f32.mrf.mxu0
    %v1407 = vadd.f32 0.0, %v1406
    %v1408 = vpop.f32.mrf.mxu0
    %v1409 = vadd.f32 0.0, %v1408
    %1410 = vdwg.mxu0
    %1411 = vmatpush.bf16.msra.mxu0 %v1100
    %1412 = vmatpush.bf16.msra.mxu0 %v1091
    %1413 = vmatpush.bf16.msra.mxu0 %v1082
    %1414 = vmatpush.bf16.msra.mxu0 %v1073
    %1415 = vmatpush.bf16.msra.mxu0 %v1064
    %1416 = vmatpush.bf16.msra.mxu0 %v1055
    %1417 = vmatpush.bf16.msra.mxu0 %v1046
    %1418 = vmatpush.bf16.msra.mxu0 %v1037
    %1419 = vmatmul.bf16.gmra.mxu0 %v51
    %v1420 = vpop.f32.mrf.mxu0
    %v1421 = vadd.f32 %v1407, %v1420
    %v1422 = vpop.f32.mrf.mxu0
    %v1423 = vadd.f32 %v1409, %v1422
    %1424 = vdwg.mxu0
    %1425 = vmatpush.bf16.msra.mxu0 %v1172
    %1426 = vmatpush.bf16.msra.mxu0 %v1163
    %1427 = vmatpush.bf16.msra.mxu0 %v1154
    %1428 = vmatpush.bf16.msra.mxu0 %v1145
    %1429 = vmatpush.bf16.msra.mxu0 %v1136
    %1430 = vmatpush.bf16.msra.mxu0 %v1127
    %1431 = vmatpush.bf16.msra.mxu0 %v1118
    %1432 = vmatpush.bf16.msra.mxu0 %v1109
    %1433 = vmatmul.bf16.gmra.mxu0 %v52
    %v1434 = vpop.f32.mrf.mxu0
    %v1435 = vadd.f32 %v1421, %v1434
    %v1436 = vpop.f32.mrf.mxu0
    %v1437 = vadd.f32 %v1423, %v1436
    %1438 = vdwg.mxu0
    %1439 = vmatpush.bf16.msra.mxu0 %v1029
    %1440 = vmatpush.bf16.msra.mxu0 %v1020
    %1441 = vmatpush.bf16.msra.mxu0 %v1011
    %1442 = vmatpush.bf16.msra.mxu0 %v1002
    %1443 = vmatpush.bf16.msra.mxu0 %v993
    %1444 = vmatpush.bf16.msra.mxu0 %v984
    %1445 = vmatpush.bf16.msra.mxu0 %v975
    %1446 = vmatpush.bf16.msra.mxu0 %v966
    %1447 = vmatmul.bf16.gmra.mxu0 %v50
    %v1448 = vpop.f32.mrf.mxu0
    %v1449 = vadd.f32 0.0, %v1448
    %v1450 = vpop.f32.mrf.mxu0
    %v1451 = vadd.f32 0.0, %v1450
    %1452 = vdwg.mxu0
    %1453 = vmatpush.bf16.msra.mxu0 %v1101
    %1454 = vmatpush.bf16.msra.mxu0 %v1092
    %1455 = vmatpush.bf16.msra.mxu0 %v1083
    %1456 = vmatpush.bf16.msra.mxu0 %v1074
    %1457 = vmatpush.bf16.msra.mxu0 %v1065
    %1458 = vmatpush.bf16.msra.mxu0 %v1056
    %1459 = vmatpush.bf16.msra.mxu0 %v1047
    %1460 = vmatpush.bf16.msra.mxu0 %v1038
    %1461 = vmatmul.bf16.gmra.mxu0 %v51
    %v1462 = vpop.f32.mrf.mxu0
    %v1463 = vadd.f32 %v1449, %v1462
    %v1464 = vpop.f32.mrf.mxu0
    %v1465 = vadd.f32 %v1451, %v1464
    %1466 = vdwg.mxu0
    %1467 = vmatpush.bf16.msra.mxu0 %v1173
    %1468 = vmatpush.bf16.msra.mxu0 %v1164
    %1469 = vmatpush.bf16.msra.mxu0 %v1155
    %1470 = vmatpush.bf16.msra.mxu0 %v1146
    %1471 = vmatpush.bf16.msra.mxu0 %v1137
    %1472 = vmatpush.bf16.msra.mxu0 %v1128
    %1473 = vmatpush.bf16.msra.mxu0 %v1119
    %1474 = vmatpush.bf16.msra.mxu0 %v1110
    %1475 = vmatmul.bf16.gmra.mxu0 %v52
    %v1476 = vpop.f32.mrf.mxu0
    %v1477 = vadd.f32 %v1463, %v1476
    %v1478 = vpop.f32.mrf.mxu0
    %v1479 = vadd.f32 %v1465, %v1478
    %1480 = vdwg.mxu0
    %1481 = vmatpush.bf16.msra.mxu0 %v1030
    %1482 = vmatpush.bf16.msra.mxu0 %v1021
    %1483 = vmatpush.bf16.msra.mxu0 %v1012
    %1484 = vmatpush.bf16.msra.mxu0 %v1003
    %1485 = vmatpush.bf16.msra.mxu0 %v994
    %1486 = vmatpush.bf16.msra.mxu0 %v985
    %1487 = vmatpush.bf16.msra.mxu0 %v976
    %1488 = vmatpush.bf16.msra.mxu0 %v967
    %1489 = vmatmul.bf16.gmra.mxu0 %v50
    %v1490 = vpop.f32.mrf.mxu0
    %v1491 = vadd.f32 0.0, %v1490
    %v1492 = vpop.f32.mrf.mxu0
    %v1493 = vadd.f32 0.0, %v1492
    %1494 = vdwg.mxu0
    %1495 = vmatpush.bf16.msra.mxu0 %v1102
    %1496 = vmatpush.bf16.msra.mxu0 %v1093
    %1497 = vmatpush.bf16.msra.mxu0 %v1084
    %1498 = vmatpush.bf16.msra.mxu0 %v1075
    %1499 = vmatpush.bf16.msra.mxu0 %v1066
    %1500 = vmatpush.bf16.msra.mxu0 %v1057
    %1501 = vmatpush.bf16.msra.mxu0 %v1048
    %1502 = vmatpush.bf16.msra.mxu0 %v1039
    %1503 = vmatmul.bf16.gmra.mxu0 %v51
    %v1504 = vpop.f32.mrf.mxu0
    %v1505 = vadd.f32 %v1491, %v1504
    %v1506 = vpop.f32.mrf.mxu0
    %v1507 = vadd.f32 %v1493, %v1506
    %1508 = vdwg.mxu0
    %1509 = vmatpush.bf16.msra.mxu0 %v1174
    %1510 = vmatpush.bf16.msra.mxu0 %v1165
    %1511 = vmatpush.bf16.msra.mxu0 %v1156
    %1512 = vmatpush.bf16.msra.mxu0 %v1147
    %1513 = vmatpush.bf16.msra.mxu0 %v1138
    %1514 = vmatpush.bf16.msra.mxu0 %v1129
    %1515 = vmatpush.bf16.msra.mxu0 %v1120
    %1516 = vmatpush.bf16.msra.mxu0 %v1111
    %1517 = vmatmul.bf16.gmra.mxu0 %v52
    %v1518 = vpop.f32.mrf.mxu0
    %v1519 = vadd.f32 %v1505, %v1518
    %v1520 = vpop.f32.mrf.mxu0
    %v1521 = vadd.f32 %v1507, %v1520
    %1522 = vdwg.mxu0
    %1523 = vmatpush.bf16.msra.mxu0 %v1031
    %1524 = vmatpush.bf16.msra.mxu0 %v1022
    %1525 = vmatpush.bf16.msra.mxu0 %v1013
    %1526 = vmatpush.bf16.msra.mxu0 %v1004
    %1527 = vmatpush.bf16.msra.mxu0 %v995
    %1528 = vmatpush.bf16.msra.mxu0 %v986
    %1529 = vmatpush.bf16.msra.mxu0 %v977
    %1530 = vmatpush.bf16.msra.mxu0 %v968
    %1531 = vmatmul.bf16.gmra.mxu0 %v50
    %v1532 = vpop.f32.mrf.mxu0
    %v1533 = vadd.f32 0.0, %v1532
    %v1534 = vpop.f32.mrf.mxu0
    %v1535 = vadd.f32 0.0, %v1534
    %1536 = vdwg.mxu0
    %1537 = vmatpush.bf16.msra.mxu0 %v1103
    %1538 = vmatpush.bf16.msra.mxu0 %v1094
    %1539 = vmatpush.bf16.msra.mxu0 %v1085
    %1540 = vmatpush.bf16.msra.mxu0 %v1076
    %1541 = vmatpush.bf16.msra.mxu0 %v1067
    %1542 = vmatpush.bf16.msra.mxu0 %v1058
    %1543 = vmatpush.bf16.msra.mxu0 %v1049
    %1544 = vmatpush.bf16.msra.mxu0 %v1040
    %1545 = vmatmul.bf16.gmra.mxu0 %v51
    %v1546 = vpop.f32.mrf.mxu0
    %v1547 = vadd.f32 %v1533, %v1546
    %v1548 = vpop.f32.mrf.mxu0
    %v1549 = vadd.f32 %v1535, %v1548
    %1550 = vdwg.mxu0
    %1551 = vmatpush.bf16.msra.mxu0 %v1175
    %1552 = vmatpush.bf16.msra.mxu0 %v1166
    %1553 = vmatpush.bf16.msra.mxu0 %v1157
    %1554 = vmatpush.bf16.msra.mxu0 %v1148
    %1555 = vmatpush.bf16.msra.mxu0 %v1139
    %1556 = vmatpush.bf16.msra.mxu0 %v1130
    %1557 = vmatpush.bf16.msra.mxu0 %v1121
    %1558 = vmatpush.bf16.msra.mxu0 %v1112
    %1559 = vmatmul.bf16.gmra.mxu0 %v52
    %v1560 = vpop.f32.mrf.mxu0
    %v1561 = vadd.f32 %v1547, %v1560
    %v1562 = vpop.f32.mrf.mxu0
    %v1563 = vadd.f32 %v1549, %v1562
    %1564 = vdwg.mxu0
    %1565 = vmatpush.bf16.msra.mxu0 %v1032
    %1566 = vmatpush.bf16.msra.mxu0 %v1023
    %1567 = vmatpush.bf16.msra.mxu0 %v1014
    %1568 = vmatpush.bf16.msra.mxu0 %v1005
    %1569 = vmatpush.bf16.msra.mxu0 %v996
    %1570 = vmatpush.bf16.msra.mxu0 %v987
    %1571 = vmatpush.bf16.msra.mxu0 %v978
    %1572 = vmatpush.bf16.msra.mxu0 %v969
    %1573 = vmatmul.bf16.gmra.mxu0 %v50
    %v1574 = vpop.f32.mrf.mxu0
    %v1575 = vadd.f32 0.0, %v1574
    %v1576 = vpop.f32.mrf.mxu0
    %v1577 = vadd.f32 0.0, %v1576
    %1578 = vdwg.mxu0
    %1579 = vmatpush.bf16.msra.mxu0 %v1104
    %1580 = vmatpush.bf16.msra.mxu0 %v1095
    %1581 = vmatpush.bf16.msra.mxu0 %v1086
    %1582 = vmatpush.bf16.msra.mxu0 %v1077
    %1583 = vmatpush.bf16.msra.mxu0 %v1068
    %1584 = vmatpush.bf16.msra.mxu0 %v1059
    %1585 = vmatpush.bf16.msra.mxu0 %v1050
    %1586 = vmatpush.bf16.msra.mxu0 %v1041
    %1587 = vmatmul.bf16.gmra.mxu0 %v51
    %v1588 = vpop.f32.mrf.mxu0
    %v1589 = vadd.f32 %v1575, %v1588
    %v1590 = vpop.f32.mrf.mxu0
    %v1591 = vadd.f32 %v1577, %v1590
    %1592 = vdwg.mxu0
    %1593 = vmatpush.bf16.msra.mxu0 %v1176
    %1594 = vmatpush.bf16.msra.mxu0 %v1167
    %1595 = vmatpush.bf16.msra.mxu0 %v1158
    %1596 = vmatpush.bf16.msra.mxu0 %v1149
    %1597 = vmatpush.bf16.msra.mxu0 %v1140
    %1598 = vmatpush.bf16.msra.mxu0 %v1131
    %1599 = vmatpush.bf16.msra.mxu0 %v1122
    %1600 = vmatpush.bf16.msra.mxu0 %v1113
    %1601 = vmatmul.bf16.gmra.mxu0 %v52
    %v1602 = vpop.f32.mrf.mxu0
    %v1603 = vadd.f32 %v1589, %v1602
    %v1604 = vpop.f32.mrf.mxu0
    %v1605 = vadd.f32 %v1591, %v1604
    %1606 = vdwg.mxu0
    %1607 = vmatpush.bf16.msra.mxu0 %v1033
    %1608 = vmatpush.bf16.msra.mxu0 %v1024
    %1609 = vmatpush.bf16.msra.mxu0 %v1015
    %1610 = vmatpush.bf16.msra.mxu0 %v1006
    %1611 = vmatpush.bf16.msra.mxu0 %v997
    %1612 = vmatpush.bf16.msra.mxu0 %v988
    %1613 = vmatpush.bf16.msra.mxu0 %v979
    %1614 = vmatpush.bf16.msra.mxu0 %v970
    %1615 = vmatmul.bf16.gmra.mxu0 %v50
    %v1616 = vpop.f32.mrf.mxu0
    %v1617 = vadd.f32 0.0, %v1616
    %v1618 = vpop.f32.mrf.mxu0
    %v1619 = vadd.f32 0.0, %v1618
    %1620 = vdwg.mxu0
    %1621 = vmatpush.bf16.msra.mxu0 %v1105
    %1622 = vmatpush.bf16.msra.mxu0 %v1096
    %1623 = vmatpush.bf16.msra.mxu0 %v1087
    %1624 = vmatpush.bf16.msra.mxu0 %v1078
    %1625 = vmatpush.bf16.msra.mxu0 %v1069
    %1626 = vmatpush.bf16.msra.mxu0 %v1060
    %1627 = vmatpush.bf16.msra.mxu0 %v1051
    %1628 = vmatpush.bf16.msra.mxu0 %v1042
    %1629 = vmatmul.bf16.gmra.mxu0 %v51
    %v1630 = vpop.f32.mrf.mxu0
    %v1631 = vadd.f32 %v1617, %v1630
    %v1632 = vpop.f32.mrf.mxu0
    %v1633 = vadd.f32 %v1619, %v1632
    %1634 = vdwg.mxu0
    %1635 = vmatpush.bf16.msra.mxu0 %v1177
    %1636 = vmatpush.bf16.msra.mxu0 %v1168
    %1637 = vmatpush.bf16.msra.mxu0 %v1159
    %1638 = vmatpush.bf16.msra.mxu0 %v1150
    %1639 = vmatpush.bf16.msra.mxu0 %v1141
    %1640 = vmatpush.bf16.msra.mxu0 %v1132
    %1641 = vmatpush.bf16.msra.mxu0 %v1123
    %1642 = vmatpush.bf16.msra.mxu0 %v1114
    %1643 = vmatmul.bf16.gmra.mxu0 %v52
    %v1644 = vpop.f32.mrf.mxu0
    %v1645 = vadd.f32 %v1631, %v1644
    %v1646 = vpop.f32.mrf.mxu0
    %v1647 = vadd.f32 %v1633, %v1646
    %1648 = vdwg.mxu0
    %1649 = vmatpush.bf16.msra.mxu0 %v1034
    %1650 = vmatpush.bf16.msra.mxu0 %v1025
    %1651 = vmatpush.bf16.msra.mxu0 %v1016
    %1652 = vmatpush.bf16.msra.mxu0 %v1007
    %1653 = vmatpush.bf16.msra.mxu0 %v998
    %1654 = vmatpush.bf16.msra.mxu0 %v989
    %1655 = vmatpush.bf16.msra.mxu0 %v980
    %1656 = vmatpush.bf16.msra.mxu0 %v971
    %1657 = vmatmul.bf16.gmra.mxu0 %v50
    %v1658 = vpop.f32.mrf.mxu0
    %v1659 = vadd.f32 0.0, %v1658
    %v1660 = vpop.f32.mrf.mxu0
    %v1661 = vadd.f32 0.0, %v1660
    %1662 = vdwg.mxu0
    %1663 = vmatpush.bf16.msra.mxu0 %v1106
    %1664 = vmatpush.bf16.msra.mxu0 %v1097
    %1665 = vmatpush.bf16.msra.mxu0 %v1088
    %1666 = vmatpush.bf16.msra.mxu0 %v1079
    %1667 = vmatpush.bf16.msra.mxu0 %v1070
    %1668 = vmatpush.bf16.msra.mxu0 %v1061
    %1669 = vmatpush.bf16.msra.mxu0 %v1052
    %1670 = vmatpush.bf16.msra.mxu0 %v1043
    %1671 = vmatmul.bf16.gmra.mxu0 %v51
    %v1672 = vpop.f32.mrf.mxu0
    %v1673 = vadd.f32 %v1659, %v1672
    %v1674 = vpop.f32.mrf.mxu0
    %v1675 = vadd.f32 %v1661, %v1674
    %1676 = vdwg.mxu0
    %1677 = vmatpush.bf16.msra.mxu0 %v1178
    %1678 = vmatpush.bf16.msra.mxu0 %v1169
    %1679 = vmatpush.bf16.msra.mxu0 %v1160
    %1680 = vmatpush.bf16.msra.mxu0 %v1151
    %1681 = vmatpush.bf16.msra.mxu0 %v1142
    %1682 = vmatpush.bf16.msra.mxu0 %v1133
    %1683 = vmatpush.bf16.msra.mxu0 %v1124
    %1684 = vmatpush.bf16.msra.mxu0 %v1115
    %1685 = vmatmul.bf16.gmra.mxu0 %v52
    %v1686 = vpop.f32.mrf.mxu0
    %v1687 = vadd.f32 %v1673, %v1686
    %v1688 = vpop.f32.mrf.mxu0
    %v1689 = vadd.f32 %v1675, %v1688
    %1690 = vdwg.mxu0
    %1691 = vmatpush.bf16.msra.mxu0 %v1035
    %1692 = vmatpush.bf16.msra.mxu0 %v1026
    %1693 = vmatpush.bf16.msra.mxu0 %v1017
    %1694 = vmatpush.bf16.msra.mxu0 %v1008
    %1695 = vmatpush.bf16.msra.mxu0 %v999
    %1696 = vmatpush.bf16.msra.mxu0 %v990
    %1697 = vmatpush.bf16.msra.mxu0 %v981
    %1698 = vmatpush.bf16.msra.mxu0 %v972
    %1699 = vmatmul.bf16.gmra.mxu0 %v50
    %v1700 = vpop.f32.mrf.mxu0
    %v1701 = vadd.f32 0.0, %v1700
    %v1702 = vpop.f32.mrf.mxu0
    %v1703 = vadd.f32 0.0, %v1702
    %1704 = vdwg.mxu0
    %1705 = vmatpush.bf16.msra.mxu0 %v1107
    %1706 = vmatpush.bf16.msra.mxu0 %v1098
    %1707 = vmatpush.bf16.msra.mxu0 %v1089
    %1708 = vmatpush.bf16.msra.mxu0 %v1080
    %1709 = vmatpush.bf16.msra.mxu0 %v1071
    %1710 = vmatpush.bf16.msra.mxu0 %v1062
    %1711 = vmatpush.bf16.msra.mxu0 %v1053
    %1712 = vmatpush.bf16.msra.mxu0 %v1044
    %1713 = vmatmul.bf16.gmra.mxu0 %v51
    %v1714 = vpop.f32.mrf.mxu0
    %v1715 = vadd.f32 %v1701, %v1714
    %v1716 = vpop.f32.mrf.mxu0
    %v1717 = vadd.f32 %v1703, %v1716
    %1718 = vdwg.mxu0
    %1719 = vmatpush.bf16.msra.mxu0 %v1179
    %1720 = vmatpush.bf16.msra.mxu0 %v1170
    %1721 = vmatpush.bf16.msra.mxu0 %v1161
    %1722 = vmatpush.bf16.msra.mxu0 %v1152
    %1723 = vmatpush.bf16.msra.mxu0 %v1143
    %1724 = vmatpush.bf16.msra.mxu0 %v1134
    %1725 = vmatpush.bf16.msra.mxu0 %v1125
    %1726 = vmatpush.bf16.msra.mxu0 %v1116
    %1727 = vmatmul.bf16.gmra.mxu0 %v52
    %v1728 = vpop.f32.mrf.mxu0
    %v1729 = vadd.f32 %v1715, %v1728
    %v1730 = vpop.f32.mrf.mxu0
    %v1731 = vadd.f32 %v1717, %v1730
    %1732 = vdwg.mxu0
    %1733 = vmatpush.bf16.msra.mxu0 %v1036
    %1734 = vmatpush.bf16.msra.mxu0 %v1027
    %1735 = vmatpush.bf16.msra.mxu0 %v1018
    %1736 = vmatpush.bf16.msra.mxu0 %v1009
    %1737 = vmatpush.bf16.msra.mxu0 %v1000
    %1738 = vmatpush.bf16.msra.mxu0 %v991
    %1739 = vmatpush.bf16.msra.mxu0 %v982
    %1740 = vmatpush.bf16.msra.mxu0 %v973
    %1741 = vmatmul.bf16.gmra.mxu0 %v50
    %v1742 = vpop.f32.mrf.mxu0
    %v1743 = vadd.f32 0.0, %v1742
    %v1744 = vpop.f32.mrf.mxu0
    %v1745 = vadd.f32 0.0, %v1744
    %1746 = vdwg.mxu0
    %1747 = vmatpush.bf16.msra.mxu0 %v1108
    %1748 = vmatpush.bf16.msra.mxu0 %v1099
    %1749 = vmatpush.bf16.msra.mxu0 %v1090
    %1750 = vmatpush.bf16.msra.mxu0 %v1081
    %1751 = vmatpush.bf16.msra.mxu0 %v1072
    %1752 = vmatpush.bf16.msra.mxu0 %v1063
    %1753 = vmatpush.bf16.msra.mxu0 %v1054
    %1754 = vmatpush.bf16.msra.mxu0 %v1045
    %1755 = vmatmul.bf16.gmra.mxu0 %v51
    %v1756 = vpop.f32.mrf.mxu0
    %v1757 = vadd.f32 %v1743, %v1756
    %v1758 = vpop.f32.mrf.mxu0
    %v1759 = vadd.f32 %v1745, %v1758
    %1760 = vdwg.mxu0
    %1761 = vmatpush.bf16.msra.mxu0 %v1180
    %1762 = vmatpush.bf16.msra.mxu0 %v1171
    %1763 = vmatpush.bf16.msra.mxu0 %v1162
    %1764 = vmatpush.bf16.msra.mxu0 %v1153
    %1765 = vmatpush.bf16.msra.mxu0 %v1144
    %1766 = vmatpush.bf16.msra.mxu0 %v1135
    %1767 = vmatpush.bf16.msra.mxu0 %v1126
    %1768 = vmatpush.bf16.msra.mxu0 %v1117
    %1769 = vmatmul.bf16.gmra.mxu0 %v52
    %v1770 = vpop.f32.mrf.mxu0
    %v1771 = vadd.f32 %v1757, %v1770
    %v1772 = vpop.f32.mrf.mxu0
    %v1773 = vadd.f32 %v1759, %v1772
    %1774 = vdwg.mxu0
    %1775 = vmatpush.xpose.msra.mxu0 0.0
    %1776 = vmatpush.xpose.msra.mxu0 0.0
    %1777 = vmatpush.xpose.msra.mxu0 0.0
    %1778 = vmatpush.xpose.msra.mxu0 0.0
    %1779 = vmatpush.xpose.msra.mxu0 0.0
    %1780 = vmatpush.xpose.msra.mxu0 0.0
    %1781 = vmatpush.xpose.msra.mxu0 0.0
    %1782 = vmatpush.xpose.msra.mxu0 0.0
    %1783 = vmatpush.xpose.msra.mxu0 0.0
    %1784 = vmatpush.xpose.msra.mxu0 0.0
    %1785 = vmatpush.xpose.msra.mxu0 0.0
    %1786 = vmatpush.xpose.msra.mxu0 0.0
    %1787 = vmatpush.xpose.msra.mxu0 0.0
    %1788 = vmatpush.xpose.msra.mxu0 0.0
    %1789 = vmatpush.xpose.msra.mxu0 0.0
    %1790 = vmatpush.xpose.msra.mxu0 %v1561
    %1791 = vmatmul.f32.gmra.mxu0 %v1435
    %v1792 = vpop.f32.mrf.mxu0
    %v1793 = vadd.f32 0.0, %v1792
    %1794 = vdwg.mxu0
    %1795 = vmatpush.xpose.msra.mxu0 0.0
    %1796 = vmatpush.xpose.msra.mxu0 0.0
    %1797 = vmatpush.xpose.msra.mxu0 0.0
    %1798 = vmatpush.xpose.msra.mxu0 0.0
    %1799 = vmatpush.xpose.msra.mxu0 0.0
    %1800 = vmatpush.xpose.msra.mxu0 0.0
    %1801 = vmatpush.xpose.msra.mxu0 0.0
    %1802 = vmatpush.xpose.msra.mxu0 0.0
    %1803 = vmatpush.xpose.msra.mxu0 0.0
    %1804 = vmatpush.xpose.msra.mxu0 0.0
    %1805 = vmatpush.xpose.msra.mxu0 0.0
    %1806 = vmatpush.xpose.msra.mxu0 0.0
    %1807 = vmatpush.xpose.msra.mxu0 0.0
    %1808 = vmatpush.xpose.msra.mxu0 0.0
    %1809 = vmatpush.xpose.msra.mxu0 0.0
    %1810 = vmatpush.xpose.msra.mxu0 %v1563
    %1811 = vmatmul.f32.gmra.mxu0 %v1437
    %v1812 = vpop.f32.mrf.mxu0
    %v1813 = vadd.f32 0.0, %v1812
    %1814 = vdwg.mxu0
    %v1815 = vmul.f32 %v1793, 0.088388346
    %v1816 = vmul.f32 %v1813, 0.088388346
    %vm1817 = vcmask 64512
    %v1818 = vsel %vm1817, %v1815, -inf
    %v1819 = vrot.slane %v1818, 4
    %v1820 = vmax.f32 %v1818, %v1819
    %v1821 = vrot.slane %v1820, 2
    %v1822 = vmax.f32 %v1820, %v1821
    %v1823 = vrot.slane %v1822, 1
    %v1824 = vmax.f32 %v1822, %v1823
    %v1825 = vsel %vm1817, %v1816, -inf
    %v1826 = vrot.slane %v1825, 4
    %v1827 = vmax.f32 %v1825, %v1826
    %v1828 = vrot.slane %v1827, 2
    %v1829 = vmax.f32 %v1827, %v1828
    %v1830 = vrot.slane %v1829, 1
    %v1831 = vmax.f32 %v1829, %v1830
    %v1832 = vsub.f32 %v1815, %v1824
    %v1833 = vsub.f32 %v1816, %v1831
    %v1834 = vmul.f32 %v1832, 1.442695
    %v1835 = vpow.pop %v1834
    %v1836 = vmul.f32 %v1833, 1.442695
    %v1837 = vpow.pop %v1836
    %v1838 = vsel %vm1817, %v1835, 0.0
    %v1839 = vrot.slane %v1838, 4
    %v1840 = vadd.f32 %v1838, %v1839
    %v1841 = vrot.slane %v1840, 2
    %v1842 = vadd.f32 %v1840, %v1841
    %v1843 = vrot.slane %v1842, 1
    %v1844 = vadd.f32 %v1842, %v1843
    %v1845 = vsel %vm1817, %v1837, 0.0
    %v1846 = vrot.slane %v1845, 4
    %v1847 = vadd.f32 %v1845, %v1846
    %v1848 = vrot.slane %v1847, 2
    %v1849 = vadd.f32 %v1847, %v1848
    %v1850 = vrot.slane %v1849, 1
    %v1851 = vadd.f32 %v1849, %v1850
    %v1852 = vrcp.pop %v1844
    %v1853 = vrcp.pop %v1851
    %v1854 = vmul.f32 %v1835, %v1852
    %v1855 = vmul.f32 %v1837, %v1853
    %v1857 = vsel %vm1817, %v1854, 0
    %1859 = vmatpush.msra.mxu0 0.0
    %1860 = vmatpush.msra.mxu0 0.0
    %1861 = vmatpush.msra.mxu0 0.0
    %1862 = vmatpush.msra.mxu0 0.0
    %1863 = vmatpush.msra.mxu0 0.0
    %1864 = vmatpush.msra.mxu0 0.0
    %1865 = vmatpush.msra.mxu0 0.0
    %1866 = vmatpush.msra.mxu0 0.0
    %1867 = vmatpush.msra.mxu0 0.0
    %1868 = vmatpush.msra.mxu0 0.0
    %1869 = vmatpush.msra.mxu0 0.0
    %1870 = vmatpush.msra.mxu0 0.0
    %1871 = vmatpush.msra.mxu0 0.0
    %1872 = vmatpush.msra.mxu0 0.0
    %1873 = vmatpush.msra.mxu0 0.0
    %1874 = vmatpush.msra.mxu0 %v1687
    %1875 = vmatmul.f32.gmra.mxu0 %v1857
    %v1876 = vpop.f32.mrf.mxu0
    %v1877 = vadd.f32 0.0, %v1876
    %1878 = vdwg.mxu0
    %v1880 = vsel %vm1817, %v1855, 0
    %1882 = vmatpush.msra.mxu0 0.0
    %1883 = vmatpush.msra.mxu0 0.0
    %1884 = vmatpush.msra.mxu0 0.0
    %1885 = vmatpush.msra.mxu0 0.0
    %1886 = vmatpush.msra.mxu0 0.0
    %1887 = vmatpush.msra.mxu0 0.0
    %1888 = vmatpush.msra.mxu0 0.0
    %1889 = vmatpush.msra.mxu0 0.0
    %1890 = vmatpush.msra.mxu0 0.0
    %1891 = vmatpush.msra.mxu0 0.0
    %1892 = vmatpush.msra.mxu0 0.0
    %1893 = vmatpush.msra.mxu0 0.0
    %1894 = vmatpush.msra.mxu0 0.0
    %1895 = vmatpush.msra.mxu0 0.0
    %1896 = vmatpush.msra.mxu0 0.0
    %1897 = vmatpush.msra.mxu0 %v1689
    %1898 = vmatmul.f32.gmra.mxu0 %v1880
    %v1899 = vpop.f32.mrf.mxu0
    %v1900 = vadd.f32 0.0, %v1899
    %1901 = vdwg.mxu0
    %1902 = vmatpush.xpose.msra.mxu0 0.0
    %1903 = vmatpush.xpose.msra.mxu0 0.0
    %1904 = vmatpush.xpose.msra.mxu0 0.0
    %1905 = vmatpush.xpose.msra.mxu0 0.0
    %1906 = vmatpush.xpose.msra.mxu0 0.0
    %1907 = vmatpush.xpose.msra.mxu0 0.0
    %1908 = vmatpush.xpose.msra.mxu0 0.0
    %1909 = vmatpush.xpose.msra.mxu0 0.0
    %1910 = vmatpush.xpose.msra.mxu0 0.0
    %1911 = vmatpush.xpose.msra.mxu0 0.0
    %1912 = vmatpush.xpose.msra.mxu0 0.0
    %1913 = vmatpush.xpose.msra.mxu0 0.0
    %1914 = vmatpush.xpose.msra.mxu0 0.0
    %1915 = vmatpush.xpose.msra.mxu0 0.0
    %1916 = vmatpush.xpose.msra.mxu0 0.0
    %1917 = vmatpush.xpose.msra.mxu0 %v1603
    %1918 = vmatmul.f32.gmra.mxu0 %v1477
    %v1919 = vpop.f32.mrf.mxu0
    %v1920 = vadd.f32 0.0, %v1919
    %1921 = vdwg.mxu0
    %1922 = vmatpush.xpose.msra.mxu0 0.0
    %1923 = vmatpush.xpose.msra.mxu0 0.0
    %1924 = vmatpush.xpose.msra.mxu0 0.0
    %1925 = vmatpush.xpose.msra.mxu0 0.0
    %1926 = vmatpush.xpose.msra.mxu0 0.0
    %1927 = vmatpush.xpose.msra.mxu0 0.0
    %1928 = vmatpush.xpose.msra.mxu0 0.0
    %1929 = vmatpush.xpose.msra.mxu0 0.0
    %1930 = vmatpush.xpose.msra.mxu0 0.0
    %1931 = vmatpush.xpose.msra.mxu0 0.0
    %1932 = vmatpush.xpose.msra.mxu0 0.0
    %1933 = vmatpush.xpose.msra.mxu0 0.0
    %1934 = vmatpush.xpose.msra.mxu0 0.0
    %1935 = vmatpush.xpose.msra.mxu0 0.0
    %1936 = vmatpush.xpose.msra.mxu0 0.0
    %1937 = vmatpush.xpose.msra.mxu0 %v1605
    %1938 = vmatmul.f32.gmra.mxu0 %v1479
    %v1939 = vpop.f32.mrf.mxu0
    %v1940 = vadd.f32 0.0, %v1939
    %1941 = vdwg.mxu0
    %v1942 = vmul.f32 %v1920, 0.088388346
    %v1943 = vmul.f32 %v1940, 0.088388346
    %v1944 = vsel %vm1817, %v1942, -inf
    %v1945 = vrot.slane %v1944, 4
    %v1946 = vmax.f32 %v1944, %v1945
    %v1947 = vrot.slane %v1946, 2
    %v1948 = vmax.f32 %v1946, %v1947
    %v1949 = vrot.slane %v1948, 1
    %v1950 = vmax.f32 %v1948, %v1949
    %v1951 = vsel %vm1817, %v1943, -inf
    %v1952 = vrot.slane %v1951, 4
    %v1953 = vmax.f32 %v1951, %v1952
    %v1954 = vrot.slane %v1953, 2
    %v1955 = vmax.f32 %v1953, %v1954
    %v1956 = vrot.slane %v1955, 1
    %v1957 = vmax.f32 %v1955, %v1956
    %v1958 = vsub.f32 %v1942, %v1950
    %v1959 = vsub.f32 %v1943, %v1957
    %v1960 = vmul.f32 %v1958, 1.442695
    %v1961 = vpow.pop %v1960
    %v1962 = vmul.f32 %v1959, 1.442695
    %v1963 = vpow.pop %v1962
    %v1964 = vsel %vm1817, %v1961, 0.0
    %v1965 = vrot.slane %v1964, 4
    %v1966 = vadd.f32 %v1964, %v1965
    %v1967 = vrot.slane %v1966, 2
    %v1968 = vadd.f32 %v1966, %v1967
    %v1969 = vrot.slane %v1968, 1
    %v1970 = vadd.f32 %v1968, %v1969
    %v1971 = vsel %vm1817, %v1963, 0.0
    %v1972 = vrot.slane %v1971, 4
    %v1973 = vadd.f32 %v1971, %v1972
    %v1974 = vrot.slane %v1973, 2
    %v1975 = vadd.f32 %v1973, %v1974
    %v1976 = vrot.slane %v1975, 1
    %v1977 = vadd.f32 %v1975, %v1976
    %v1978 = vrcp.pop %v1970
    %v1979 = vrcp.pop %v1977
    %v1980 = vmul.f32 %v1961, %v1978
    %v1981 = vmul.f32 %v1963, %v1979
    %v1983 = vsel %vm1817, %v1980, 0
    %1985 = vmatpush.msra.mxu0 0.0
    %1986 = vmatpush.msra.mxu0 0.0
    %1987 = vmatpush.msra.mxu0 0.0
    %1988 = vmatpush.msra.mxu0 0.0
    %1989 = vmatpush.msra.mxu0 0.0
    %1990 = vmatpush.msra.mxu0 0.0
    %1991 = vmatpush.msra.mxu0 0.0
    %1992 = vmatpush.msra.mxu0 0.0
    %1993 = vmatpush.msra.mxu0 0.0
    %1994 = vmatpush.msra.mxu0 0.0
    %1995 = vmatpush.msra.mxu0 0.0
    %1996 = vmatpush.msra.mxu0 0.0
    %1997 = vmatpush.msra.mxu0 0.0
    %1998 = vmatpush.msra.mxu0 0.0
    %1999 = vmatpush.msra.mxu0 0.0
    %2000 = vmatpush.msra.mxu0 %v1729
    %2001 = vmatmul.f32.gmra.mxu0 %v1983
    %v2002 = vpop.f32.mrf.mxu0
    %v2003 = vadd.f32 0.0, %v2002
    %2004 = vdwg.mxu0
    %v2006 = vsel %vm1817, %v1981, 0
    %2008 = vmatpush.msra.mxu0 0.0
    %2009 = vmatpush.msra.mxu0 0.0
    %2010 = vmatpush.msra.mxu0 0.0
    %2011 = vmatpush.msra.mxu0 0.0
    %2012 = vmatpush.msra.mxu0 0.0
    %2013 = vmatpush.msra.mxu0 0.0
    %2014 = vmatpush.msra.mxu0 0.0
    %2015 = vmatpush.msra.mxu0 0.0
    %2016 = vmatpush.msra.mxu0 0.0
    %2017 = vmatpush.msra.mxu0 0.0
    %2018 = vmatpush.msra.mxu0 0.0
    %2019 = vmatpush.msra.mxu0 0.0
    %2020 = vmatpush.msra.mxu0 0.0
    %2021 = vmatpush.msra.mxu0 0.0
    %2022 = vmatpush.msra.mxu0 0.0
    %2023 = vmatpush.msra.mxu0 %v1731
    %2024 = vmatmul.f32.gmra.mxu0 %v2006
    %v2025 = vpop.f32.mrf.mxu0
    %v2026 = vadd.f32 0.0, %v2025
    %2027 = vdwg.mxu0
    %2028 = vmatpush.xpose.msra.mxu0 0.0
    %2029 = vmatpush.xpose.msra.mxu0 0.0
    %2030 = vmatpush.xpose.msra.mxu0 0.0
    %2031 = vmatpush.xpose.msra.mxu0 0.0
    %2032 = vmatpush.xpose.msra.mxu0 0.0
    %2033 = vmatpush.xpose.msra.mxu0 0.0
    %2034 = vmatpush.xpose.msra.mxu0 0.0
    %2035 = vmatpush.xpose.msra.mxu0 0.0
    %2036 = vmatpush.xpose.msra.mxu0 0.0
    %2037 = vmatpush.xpose.msra.mxu0 0.0
    %2038 = vmatpush.xpose.msra.mxu0 0.0
    %2039 = vmatpush.xpose.msra.mxu0 0.0
    %2040 = vmatpush.xpose.msra.mxu0 0.0
    %2041 = vmatpush.xpose.msra.mxu0 0.0
    %2042 = vmatpush.xpose.msra.mxu0 0.0
    %2043 = vmatpush.xpose.msra.mxu0 %v1645
    %2044 = vmatmul.f32.gmra.mxu0 %v1519
    %v2045 = vpop.f32.mrf.mxu0
    %v2046 = vadd.f32 0.0, %v2045
    %2047 = vdwg.mxu0
    %2048 = vmatpush.xpose.msra.mxu0 0.0
    %2049 = vmatpush.xpose.msra.mxu0 0.0
    %2050 = vmatpush.xpose.msra.mxu0 0.0
    %2051 = vmatpush.xpose.msra.mxu0 0.0
    %2052 = vmatpush.xpose.msra.mxu0 0.0
    %2053 = vmatpush.xpose.msra.mxu0 0.0
    %2054 = vmatpush.xpose.msra.mxu0 0.0
    %2055 = vmatpush.xpose.msra.mxu0 0.0
    %2056 = vmatpush.xpose.msra.mxu0 0.0
    %2057 = vmatpush.xpose.msra.mxu0 0.0
    %2058 = vmatpush.xpose.msra.mxu0 0.0
    %2059 = vmatpush.xpose.msra.mxu0 0.0
    %2060 = vmatpush.xpose.msra.mxu0 0.0
    %2061 = vmatpush.xpose.msra.mxu0 0.0
    %2062 = vmatpush.xpose.msra.mxu0 0.0
    %2063 = vmatpush.xpose.msra.mxu0 %v1647
    %2064 = vmatmul.f32.gmra.mxu0 %v1521
    %v2065 = vpop.f32.mrf.mxu0
    %v2066 = vadd.f32 0.0, %v2065
    %2067 = vdwg.mxu0
    %v2068 = vmul.f32 %v2046, 0.088388346
    %v2069 = vmul.f32 %v2066, 0.088388346
    %v2070 = vsel %vm1817, %v2068, -inf
    %v2071 = vrot.slane %v2070, 4
    %v2072 = vmax.f32 %v2070, %v2071
    %v2073 = vrot.slane %v2072, 2
    %v2074 = vmax.f32 %v2072, %v2073
    %v2075 = vrot.slane %v2074, 1
    %v2076 = vmax.f32 %v2074, %v2075
    %v2077 = vsel %vm1817, %v2069, -inf
    %v2078 = vrot.slane %v2077, 4
    %v2079 = vmax.f32 %v2077, %v2078
    %v2080 = vrot.slane %v2079, 2
    %v2081 = vmax.f32 %v2079, %v2080
    %v2082 = vrot.slane %v2081, 1
    %v2083 = vmax.f32 %v2081, %v2082
    %v2084 = vsub.f32 %v2068, %v2076
    %v2085 = vsub.f32 %v2069, %v2083
    %v2086 = vmul.f32 %v2084, 1.442695
    %v2087 = vpow.pop %v2086
    %v2088 = vmul.f32 %v2085, 1.442695
    %v2089 = vpow.pop %v2088
    %v2090 = vsel %vm1817, %v2087, 0.0
    %v2091 = vrot.slane %v2090, 4
    %v2092 = vadd.f32 %v2090, %v2091
    %v2093 = vrot.slane %v2092, 2
    %v2094 = vadd.f32 %v2092, %v2093
    %v2095 = vrot.slane %v2094, 1
    %v2096 = vadd.f32 %v2094, %v2095
    %v2097 = vsel %vm1817, %v2089, 0.0
    %v2098 = vrot.slane %v2097, 4
    %v2099 = vadd.f32 %v2097, %v2098
    %v2100 = vrot.slane %v2099, 2
    %v2101 = vadd.f32 %v2099, %v2100
    %v2102 = vrot.slane %v2101, 1
    %v2103 = vadd.f32 %v2101, %v2102
    %v2104 = vrcp.pop %v2096
    %v2105 = vrcp.pop %v2103
    %v2106 = vmul.f32 %v2087, %v2104
    %v2107 = vmul.f32 %v2089, %v2105
    %v2109 = vsel %vm1817, %v2106, 0
    %2111 = vmatpush.msra.mxu0 0.0
    %2112 = vmatpush.msra.mxu0 0.0
    %2113 = vmatpush.msra.mxu0 0.0
    %2114 = vmatpush.msra.mxu0 0.0
    %2115 = vmatpush.msra.mxu0 0.0
    %2116 = vmatpush.msra.mxu0 0.0
    %2117 = vmatpush.msra.mxu0 0.0
    %2118 = vmatpush.msra.mxu0 0.0
    %2119 = vmatpush.msra.mxu0 0.0
    %2120 = vmatpush.msra.mxu0 0.0
    %2121 = vmatpush.msra.mxu0 0.0
    %2122 = vmatpush.msra.mxu0 0.0
    %2123 = vmatpush.msra.mxu0 0.0
    %2124 = vmatpush.msra.mxu0 0.0
    %2125 = vmatpush.msra.mxu0 0.0
    %2126 = vmatpush.msra.mxu0 %v1771
    %2127 = vmatmul.f32.gmra.mxu0 %v2109
    %v2128 = vpop.f32.mrf.mxu0
    %v2129 = vadd.f32 0.0, %v2128
    %2130 = vdwg.mxu0
    %v2132 = vsel %vm1817, %v2107, 0
    %2134 = vmatpush.msra.mxu0 0.0
    %2135 = vmatpush.msra.mxu0 0.0
    %2136 = vmatpush.msra.mxu0 0.0
    %2137 = vmatpush.msra.mxu0 0.0
    %2138 = vmatpush.msra.mxu0 0.0
    %2139 = vmatpush.msra.mxu0 0.0
    %2140 = vmatpush.msra.mxu0 0.0
    %2141 = vmatpush.msra.mxu0 0.0
    %2142 = vmatpush.msra.mxu0 0.0
    %2143 = vmatpush.msra.mxu0 0.0
    %2144 = vmatpush.msra.mxu0 0.0
    %2145 = vmatpush.msra.mxu0 0.0
    %2146 = vmatpush.msra.mxu0 0.0
    %2147 = vmatpush.msra.mxu0 0.0
    %2148 = vmatpush.msra.mxu0 0.0
    %2149 = vmatpush.msra.mxu0 %v1773
    %2150 = vmatmul.f32.gmra.mxu0 %v2132
    %v2151 = vpop.f32.mrf.mxu0
    %v2152 = vadd.f32 0.0, %v2151
    %2153 = vdwg.mxu0
    %2154 = vst [vmem:[#allocation7] sm:$0xff] %v1877
    %2155 = vst [vmem:[#allocation7 + $0x8] sm:$0xff] %v2003
    %2156 = vst [vmem:[#allocation7 + $0x10] sm:$0xff] %v2129
    %2157 = vst [vmem:[#allocation7 + $0x18] sm:$0xff] %v1900
    %2158 = vst [vmem:[#allocation7 + $0x20] sm:$0xff] %v2026
    %2159 = vst [vmem:[#allocation7 + $0x28] sm:$0xff] %v2152
    // Predicated region
    $region18: #{tpu_custom_call.1} parent=1 // pred_check
      _
    $region19: #{tpu_custom_call.1} parent=1 // pred_check_branch
      %2161 = sbr.rel (0) target = $region21
    $region20: #{tpu_custom_call.1} parent=1 // pred_region
      %2163 = vsyncadd [#allocation4], 0
      %s2164 = sshll.u32 [#allocation7], 4
      %s2165 = int_to_ptr.vmem [resolvable:$true] %s2164
      %s2166 = sshll.u32 %s2, 4
      %s2167 = int_to_ptr.hbm [resolvable:$true] %s2166
      %2172 = dma.vmem_to_hbm [thread:$0]  %s2165, 768, %s2167, [#allocation4], 384, 384, 24
    $region21: #{tpu_custom_call.1} parent=1 // pred_fallthru
      _
    // Predicated region
    $region22: #{tpu_custom_call.1} parent=1 // pred_check
      _
    $region23: #{tpu_custom_call.1} parent=1 // pred_check_branch
      %2174 = sbr.rel (0) target = $region25
    $region24: #{tpu_custom_call.1} parent=1 // pred_region
      %2176 = dma.done [#allocation4], 768
    $region25: #{tpu_custom_call.1} parent=1 // pred_fallthru
      _
    %2177 = vsyncpa [#allocation3], 1
    %2178 = vsyncpa [#allocation6], 1
    %2179 = vsyncpa [#allocation4], 1

</llo_original>
